<compile_context>
chip_gen: v5e
topology: v5e:2x2
jax: 0.10.0
libtpu: 0.0.40
codegen_flags: <defaults>
</compile_context>

<pallas_src>
import functools
import math

import jax
import jax.numpy as jnp
from jax import lax
from jax.experimental import pallas as pl
from jax.experimental.pallas import tpu as pltpu


def _mhsa_kernel(x_ref, wqkv_ref, wo_ref, o_ref, qkv_ref, attn_ref,
                 *, num_heads, d_head, tq, seq_len, d_model):
    qi = pl.program_id(1)
    S = seq_len
    D = d_model
    compute_dtype = x_ref.dtype

    # ---- Once per batch element: fused QKV projection for the whole sequence
    # into a persistent VMEM scratch (scale already folded into the Q weights).
    # Done in tq-row chunks so the f32 matmul result never exceeds (tq, 3D).
    @pl.when(qi == 0)
    def _():
        def proj_body(i, carry):
            r = pl.multiple_of(i * tq, tq)
            qkv_ref[pl.ds(r, tq), :] = jnp.dot(
                x_ref[0, pl.ds(r, tq), :], wqkv_ref[...],
                preferred_element_type=jnp.float32).astype(qkv_ref.dtype)
            return carry
        lax.fori_loop(0, S // tq, proj_body, 0, unroll=(S // tq) <= 4)

    q_start = pl.multiple_of(qi * tq, tq)

    # Causal bias for the diagonal KV block only (tkv == tq). Finite large
    # negative (not -inf): the diagonal entry is always unmasked, so no NaNs.
    row = lax.broadcasted_iota(jnp.int32, (tq, tq), 0)
    col = lax.broadcasted_iota(jnp.int32, (tq, tq), 1)
    diag_bias = jnp.where(col <= row, 0.0, -1e30).astype(jnp.float32)

    # Contract the last dims of q and k directly (no transpose relayout).
    dims = (((1,), (1,)), ((), ()))

    for h in range(num_heads):                        # static; small H in demo
        lo = h * d_head
        hi = lo + d_head
        qh = qkv_ref[pl.ds(q_start, tq), lo:hi]       # (tq, d_head), pre-scaled

        def kv_step(k_start, m, l, acc, bias):
            kh = qkv_ref[pl.ds(k_start, tq), D + lo:D + hi]           # (tq, dh)
            vh = qkv_ref[pl.ds(k_start, tq), 2 * D + lo:2 * D + hi]   # (tq, dh)
            s = lax.dot_general(qh, kh, dims,
                                preferred_element_type=jnp.float32)   # (tq, tq)
            if bias is not None:
                s = s + bias
            m_new = jnp.maximum(m, jnp.max(s, axis=-1, keepdims=True))
            alpha = jnp.exp(m - m_new)
            p = jnp.exp(s - m_new)
            l_new = alpha * l + jnp.sum(p, axis=-1, keepdims=True)
            acc_new = alpha * acc + jnp.dot(p.astype(compute_dtype), vh,
                                            preferred_element_type=jnp.float32)
            return m_new, l_new, acc_new

        m0 = jnp.full((tq, 1), -jnp.inf, dtype=jnp.float32)
        l0 = jnp.zeros((tq, 1), dtype=jnp.float32)
        acc0 = jnp.zeros((tq, d_head), dtype=jnp.float32)

        # Off-diagonal (fully unmasked) KV blocks 0 .. qi-1.  Blocks above the
        # causal diagonal are never visited at all (block skipping).
        def kv_body(kv, carry):
            m, l, acc = carry
            k_start = pl.multiple_of(kv * tq, tq)
            return kv_step(k_start, m, l, acc, bias=None)

        m_i, l_i, acc_i = lax.fori_loop(0, qi, kv_body, (m0, l0, acc0))

        # Diagonal block — the only one that needs the causal mask.
        m_i, l_i, acc_i = kv_step(q_start, m_i, l_i, acc_i, bias=diag_bias)

        # Normalize AFTER the PV matmul; EUP approx reciprocal + 1 Newton step.
        inv = pl.reciprocal(l_i, approx=True)
        inv = inv * (2.0 - l_i * inv)
        attn_ref[:, lo:hi] = (acc_i * inv).astype(attn_ref.dtype)

    # Single full-width output projection for this q tile: (tq, D) x (D, D).
    o_ref[0] = jnp.dot(attn_ref[...], wo_ref[...],
                       preferred_element_type=jnp.float32).astype(o_ref.dtype)


def multihead_self_attention(x, q_w, k_w, v_w, o_w, num_heads, *, tq=None):
    """x: (B, S, D); *_w: (D, D) in PyTorch (out_features, in_features) layout."""
    B, S, D = x.shape
    assert D % num_heads == 0
    d_head = D // num_heads

    if tq is None:
        # >=256-row LHS tiles keep the v6e MXU fed; tiny S just uses the full
        # sequence as one block.
        tq = min(S, 256)
    assert S % tq == 0, "seq_len must be a multiple of the query tile"
    num_q_blocks = S // tq

    # Host-side (free) pre-transposes; fold 1/sqrt(d_head) into the Q columns so
    # the kernel never performs the attention scale multiply.
    scale = 1.0 / math.sqrt(d_head)
    wqkv = jnp.concatenate([q_w.T * scale, k_w.T, v_w.T], axis=1).astype(x.dtype)
    wo_t = o_w.T.astype(x.dtype)                                         # (D, D)

    kernel = functools.partial(_mhsa_kernel, num_heads=num_heads, d_head=d_head,
                               tq=tq, seq_len=S, d_model=D)

    grid_spec = pltpu.PrefetchScalarGridSpec(
        num_scalar_prefetch=0,
        grid=(B, num_q_blocks),
        in_specs=[
            # x: constant over the q-block axis -> DMA'd once per batch element.
            pl.BlockSpec((1, S, D), lambda b, q: (b, 0, 0)),
            # Weights: constant index_map + single-buffered (resident, no 2x VMEM).
            pl.BlockSpec((D, 3 * D), lambda b, q: (0, 0),
                         pipeline_mode=pl.Buffered(1)),
            pl.BlockSpec((D, D), lambda b, q: (0, 0),
                         pipeline_mode=pl.Buffered(1)),
        ],
        out_specs=pl.BlockSpec((1, tq, D), lambda b, q: (b, q, 0)),
        scratch_shapes=[
            pltpu.VMEM((S, 3 * D), x.dtype),   # fused QKV, persists across q blocks
            pltpu.VMEM((tq, D), x.dtype),      # per-head context slab for this tile
        ],
    )

    # VMEM footprint of the tiled kernel (+ headroom), instead of a flat limit.
    itemsize = jnp.dtype(x.dtype).itemsize
    footprint = (2 * S * D            # x block, double-buffered
                 + D * 3 * D          # wqkv, single-buffered
                 + D * D              # wo, single-buffered
                 + 2 * tq * D         # output block, double-buffered
                 + S * 3 * D          # qkv scratch
                 + tq * D) * itemsize # attn scratch
    vmem_limit = int(min(max(2 * footprint, 8 * 1024 * 1024), 64 * 1024 * 1024))

    # Advisory cost estimate (causal attention ~ half the full S^2 work).
    flops = int(2 * B * S * D * 3 * D
                + 2 * B * num_heads * S * S * d_head     # QK^T + PV, causal half
                + 2 * B * S * D * D)
    transcendentals = int(B * num_heads * S * S // 2)
    bytes_accessed = int((x.size + wqkv.size + wo_t.size + B * S * D) * itemsize)
    cost = pl.CostEstimate(flops=flops, transcendentals=transcendentals,
                           bytes_accessed=bytes_accessed)

    return pl.pallas_call(
        kernel,
        out_shape=jax.ShapeDtypeStruct((B, S, D), x.dtype),
        grid_spec=grid_spec,
        compiler_params=pltpu.CompilerParams(
            # q-block axis must be "arbitrary": it reuses the per-batch QKV
            # scratch computed at qi == 0.
            dimension_semantics=("parallel", "arbitrary"),
            vmem_limit_bytes=vmem_limit,
        ),
        cost_estimate=cost,
    )(x, wqkv, wo_t)


def _reference(x, q_w, k_w, v_w, o_w, num_heads):
    B, S, D = x.shape
    d_head = D // num_heads
    Q = jnp.einsum("bsd,kd->bsk", x, q_w)
    K = jnp.einsum("bsd,kd->bsk", x, k_w)
    V = jnp.einsum("bsd,kd->bsk", x, v_w)
    Q = Q.reshape(B, S, num_heads, d_head).transpose(0, 2, 1, 3)
    K = K.reshape(B, S, num_heads, d_head).transpose(0, 2, 1, 3)
    V = V.reshape(B, S, num_heads, d_head).transpose(0, 2, 1, 3)
    s = jnp.einsum("bhmd,bhnd->bhmn", Q, K) / jnp.sqrt(jnp.float32(d_head))
    mask = jnp.tril(jnp.ones((S, S), dtype=bool))
    s = jnp.where(mask, s, -jnp.inf)
    m = jnp.max(s, axis=-1, keepdims=True)
    e = jnp.exp(s - m)
    p = e / jnp.sum(e, axis=-1, keepdims=True)
    a = jnp.einsum("bhmn,bhnd->bhmd", p, V)
    a = a.transpose(0, 2, 1, 3).reshape(B, S, D)
    return jnp.einsum("bsv,mv->bsm", a, o_w)


if __name__ == "__main__":
    B, S, D, H = 2, 8, 32, 4
    key = jax.random.PRNGKey(0)
    kx, kq, kk, kv, ko = jax.random.split(key, 5)
    wscale = 1.0 / (D ** 0.5)
    x = jax.random.normal(kx, (B, S, D), dtype=jnp.float32)
    q_w = jax.random.normal(kq, (D, D), dtype=jnp.float32) * wscale
    k_w = jax.random.normal(kk, (D, D), dtype=jnp.float32) * wscale
    v_w = jax.random.normal(kv, (D, D), dtype=jnp.float32) * wscale
    o_w = jax.random.normal(ko, (D, D), dtype=jnp.float32) * wscale

    out = multihead_self_attention(x, q_w, k_w, v_w, o_w, H)
    out = jax.block_until_ready(out)

    ref = _reference(x, q_w, k_w, v_w, o_w, H)
    assert jnp.allclose(out, ref, atol=2e-3, rtol=2e-3), "mismatch vs reference"
    print("KERNEL_OK")
</pallas_src>

<mosaic_0001>
module attributes {stable_mosaic.version = 11 : i64} {
  func.func @_mhsa_kernel(%arg0: i32, %arg1: i32, %arg2: memref<1x8x32xf32, #tpu.memory_space<vmem>>, %arg3: memref<32x96xf32, #tpu.memory_space<vmem>>, %arg4: memref<32x32xf32, #tpu.memory_space<vmem>>, %arg5: memref<1x8x32xf32, #tpu.memory_space<vmem>>, %arg6: memref<8x96xf32, #tpu.memory_space<vmem>>, %arg7: memref<8x32xf32, #tpu.memory_space<vmem>>) attributes {dimension_semantics = [#tpu.dimension_semantics<parallel>, #tpu.dimension_semantics<arbitrary>], iteration_bounds = array<i64: 2, 1>, scalar_prefetch = 0 : i64, scratch_operands = 2 : i64, tpu.core_type = #tpu.core_type<tc>, window_params = [{transform_indices = @transform_0, window_bounds = array<i64: 1, 8, 32>}, {pipeline_mode = #tpu.pipeline_mode<synchronous>, transform_indices = @transform_1, window_bounds = array<i64: 32, 96>}, {pipeline_mode = #tpu.pipeline_mode<synchronous>, transform_indices = @transform_2, window_bounds = array<i64: 32, 32>}, {transform_indices = @transform_3, window_bounds = array<i64: 1, 8, 32>}]} {
    %c0_i32 = arith.constant 0 : i32
    %0 = arith.cmpi eq, %arg1, %c0_i32 : i32
    %1 = arith.extui %0 : i1 to i32
    %c0_i32_0 = arith.constant 0 : i32
    %2 = arith.cmpi ne, %1, %c0_i32_0 : i32
    scf.if %2 {
      %c0_i32_57 = arith.constant 0 : i32
      %c8_i32_58 = arith.constant 8 : i32
      %169 = arith.muli %c0_i32_57, %c8_i32_58 : i32
      %170 = tpu.assume_multiple %169, 8 : i32
      %c0_59 = arith.constant 0 : index
      %171 = arith.index_cast %170 : i32 to index
      %c0_60 = arith.constant 0 : index
      %172 = vector.load %arg2[%c0_59, %171, %c0_60] : memref<1x8x32xf32, #tpu.memory_space<vmem>>, vector<1x8x32xf32>
      %173 = vector.shape_cast %172 : vector<1x8x32xf32> to vector<8x32xf32>
      %c0_61 = arith.constant 0 : index
      %c0_62 = arith.constant 0 : index
      %174 = vector.load %arg3[%c0_61, %c0_62] : memref<32x96xf32, #tpu.memory_space<vmem>>, vector<32x96xf32>
      %cst_63 = arith.constant dense<0.000000e+00> : vector<8x96xf32>
      %175 = tpu.matmul %173, %174, %cst_63 {dimension_numbers = #tpu.dot_dimension_numbers<[1], [0], [0], [1], [0, 0, 1, 1], [], []>} : vector<8x32xf32>, vector<32x96xf32>, vector<8x96xf32> -> vector<8x96xf32>
      %176 = arith.index_cast %170 : i32 to index
      %c0_64 = arith.constant 0 : index
      %177 = vector.load %arg6[%176, %c0_64] : memref<8x96xf32, #tpu.memory_space<vmem>>, vector<8x96xf32>
      tpu.vector_store %arg6[%176, %c0_64], %175 {strides = array<i32>} : memref<8x96xf32, #tpu.memory_space<vmem>>, vector<8x96xf32>,
      %c1_i32_65 = arith.constant 1 : i32
    } else {
    }
    %c8_i32 = arith.constant 8 : i32
    %3 = arith.muli %arg1, %c8_i32 : i32
    %4 = tpu.assume_multiple %3, 8 : i32
    %5 = tpu.iota {dimensions = array<i32: 0>} : vector<8x8xi32>
    %6 = tpu.iota {dimensions = array<i32: 1>} : vector<8x8xi32>
    %7 = arith.cmpi sle, %6, %5 : vector<8x8xi32>
    %cst = arith.constant 0.000000e+00 : f32
    %cst_1 = arith.constant -1.000000e+30 : f32
    %8 = vector.broadcast %cst : f32 to vector<8x8xf32>
    %9 = vector.broadcast %cst_1 : f32 to vector<8x8xf32>
    %10 = arith.select %7, %8, %9 : vector<8x8xi1>, vector<8x8xf32>
    %11 = arith.index_cast %4 : i32 to index
    %c0 = arith.constant 0 : index
    %12 = vector.load %arg6[%11, %c0] : memref<8x96xf32, #tpu.memory_space<vmem>>, vector<8x8xf32>
    %cst_2 = arith.constant 0xFF800000 : f32
    %13 = vector.broadcast %cst_2 : f32 to vector<8x1xf32>
    %cst_3 = arith.constant 0.000000e+00 : f32
    %14 = vector.broadcast %cst_3 : f32 to vector<8x1xf32>
    %cst_4 = arith.constant 0.000000e+00 : f32
    %15 = vector.broadcast %cst_4 : f32 to vector<8x8xf32>
    %c0_i32_5 = arith.constant 0 : i32
    %16 = arith.subi %arg1, %c0_i32_5 : i32
    %17 = arith.addi %c0_i32_5, %16 : i32
    %c1_i32 = arith.constant 1 : i32
    %18:3 = scf.for %arg8 = %c0_i32_5 to %17 step %c1_i32 iter_args(%arg9 = %13, %arg10 = %14, %arg11 = %15) -> (vector<8x1xf32>, vector<8x1xf32>, vector<8x8xf32>)  : i32 {
      %c8_i32_57 = arith.constant 8 : i32
      %169 = arith.muli %arg8, %c8_i32_57 : i32
      %170 = tpu.assume_multiple %169, 8 : i32
      %171 = arith.index_cast %170 : i32 to index
      %c32_58 = arith.constant 32 : index
      %172 = vector.load %arg6[%171, %c32_58] : memref<8x96xf32, #tpu.memory_space<vmem>>, vector<8x8xf32>
      %173 = arith.index_cast %170 : i32 to index
      %c64_59 = arith.constant 64 : index
      %174 = vector.load %arg6[%173, %c64_59] : memref<8x96xf32, #tpu.memory_space<vmem>>, vector<8x8xf32>
      %cst_60 = arith.constant dense<0.000000e+00> : vector<8x8xf32>
      %175 = tpu.matmul %12, %172, %cst_60 {dimension_numbers = #tpu.dot_dimension_numbers<[1], [1], [0], [0], [0, 0, 1, 0], [], []>} : vector<8x8xf32>, vector<8x8xf32>, vector<8x8xf32> -> vector<8x8xf32>
      %cst_61 = arith.constant dense<0xFF800000> : vector<8xf32>
      %176 = vector.multi_reduction <maximumf>, %175, %cst_61 [1] : vector<8x8xf32> to vector<8xf32>
      %177 = vector.shape_cast %176 : vector<8xf32> to vector<8x1xf32>
      %178 = arith.maximumf %arg9, %177 : vector<8x1xf32>
      %179 = arith.subf %arg9, %178 : vector<8x1xf32>
      %180 = math.exp %179 : vector<8x1xf32>
      %181 = vector.broadcast %178 : vector<8x1xf32> to vector<8x8xf32>
      %182 = arith.subf %175, %181 : vector<8x8xf32>
      %183 = math.exp %182 : vector<8x8xf32>
      %184 = arith.mulf %180, %arg10 : vector<8x1xf32>
      %cst_62 = arith.constant dense<0.000000e+00> : vector<8xf32>
      %185 = vector.multi_reduction <add>, %183, %cst_62 [1] : vector<8x8xf32> to vector<8xf32>
      %186 = vector.shape_cast %185 : vector<8xf32> to vector<8x1xf32>
      %187 = arith.addf %184, %186 : vector<8x1xf32>
      %188 = vector.broadcast %180 : vector<8x1xf32> to vector<8x8xf32>
      %189 = arith.mulf %188, %arg11 : vector<8x8xf32>
      %cst_63 = arith.constant dense<0.000000e+00> : vector<8x8xf32>
      %190 = tpu.matmul %183, %174, %cst_63 {dimension_numbers = #tpu.dot_dimension_numbers<[1], [0], [0], [1], [0, 0, 1, 1], [], []>} : vector<8x8xf32>, vector<8x8xf32>, vector<8x8xf32> -> vector<8x8xf32>
      %191 = arith.addf %189, %190 : vector<8x8xf32>
      scf.yield %178, %187, %191 : vector<8x1xf32>, vector<8x1xf32>, vector<8x8xf32>
    }
    %19 = arith.index_cast %4 : i32 to index
    %c32 = arith.constant 32 : index
    %20 = vector.load %arg6[%19, %c32] : memref<8x96xf32, #tpu.memory_space<vmem>>, vector<8x8xf32>
    %21 = arith.index_cast %4 : i32 to index
    %c64 = arith.constant 64 : index
    %22 = vector.load %arg6[%21, %c64] : memref<8x96xf32, #tpu.memory_space<vmem>>, vector<8x8xf32>
    %cst_6 = arith.constant dense<0.000000e+00> : vector<8x8xf32>
    %23 = tpu.matmul %12, %20, %cst_6 {dimension_numbers = #tpu.dot_dimension_numbers<[1], [1], [0], [0], [0, 0, 1, 0], [], []>} : vector<8x8xf32>, vector<8x8xf32>, vector<8x8xf32> -> vector<8x8xf32>
    %24 = arith.addf %23, %10 : vector<8x8xf32>
    %cst_7 = arith.constant dense<0xFF800000> : vector<8xf32>
    %25 = vector.multi_reduction <maximumf>, %24, %cst_7 [1] : vector<8x8xf32> to vector<8xf32>
    %26 = vector.shape_cast %25 : vector<8xf32> to vector<8x1xf32>
    %27 = arith.maximumf %18#0, %26 : vector<8x1xf32>
    %28 = arith.subf %18#0, %27 : vector<8x1xf32>
    %29 = math.exp %28 : vector<8x1xf32>
    %30 = vector.broadcast %27 : vector<8x1xf32> to vector<8x8xf32>
    %31 = arith.subf %24, %30 : vector<8x8xf32>
    %32 = math.exp %31 : vector<8x8xf32>
    %33 = arith.mulf %29, %18#1 : vector<8x1xf32>
    %cst_8 = arith.constant dense<0.000000e+00> : vector<8xf32>
    %34 = vector.multi_reduction <add>, %32, %cst_8 [1] : vector<8x8xf32> to vector<8xf32>
    %35 = vector.shape_cast %34 : vector<8xf32> to vector<8x1xf32>
    %36 = arith.addf %33, %35 : vector<8x1xf32>
    %37 = vector.broadcast %29 : vector<8x1xf32> to vector<8x8xf32>
    %38 = arith.mulf %37, %18#2 : vector<8x8xf32>
    %cst_9 = arith.constant dense<0.000000e+00> : vector<8x8xf32>
    %39 = tpu.matmul %32, %22, %cst_9 {dimension_numbers = #tpu.dot_dimension_numbers<[1], [0], [0], [1], [0, 0, 1, 1], [], []>} : vector<8x8xf32>, vector<8x8xf32>, vector<8x8xf32> -> vector<8x8xf32>
    %40 = arith.addf %38, %39 : vector<8x8xf32>
    %41 = tpu.reciprocal %36 {approx = true} : vector<8x1xf32> -> vector<8x1xf32>
    %42 = arith.mulf %36, %41 : vector<8x1xf32>
    %cst_10 = arith.constant 2.000000e+00 : f32
    %43 = vector.broadcast %cst_10 : f32 to vector<8x1xf32>
    %44 = arith.subf %43, %42 : vector<8x1xf32>
    %45 = arith.mulf %41, %44 : vector<8x1xf32>
    %46 = vector.broadcast %45 : vector<8x1xf32> to vector<8x8xf32>
    %47 = arith.mulf %40, %46 : vector<8x8xf32>
    %c0_11 = arith.constant 0 : index
    %c0_12 = arith.constant 0 : index
    %48 = vector.load %arg7[%c0_11, %c0_12] : memref<8x32xf32, #tpu.memory_space<vmem>>, vector<8x8xf32>
    tpu.vector_store %arg7[%c0_11, %c0_12], %47 {strides = array<i32>} : memref<8x32xf32, #tpu.memory_space<vmem>>, vector<8x8xf32>,
    %49 = arith.index_cast %4 : i32 to index
    %c8 = arith.constant 8 : index
    %50 = vector.load %arg6[%49, %c8] : memref<8x96xf32, #tpu.memory_space<vmem>>, vector<8x8xf32>
    %cst_13 = arith.constant 0xFF800000 : f32
    %51 = vector.broadcast %cst_13 : f32 to vector<8x1xf32>
    %cst_14 = arith.constant 0.000000e+00 : f32
    %52 = vector.broadcast %cst_14 : f32 to vector<8x1xf32>
    %cst_15 = arith.constant 0.000000e+00 : f32
    %53 = vector.broadcast %cst_15 : f32 to vector<8x8xf32>
    %c0_i32_16 = arith.constant 0 : i32
    %54 = arith.subi %arg1, %c0_i32_16 : i32
    %55 = arith.addi %c0_i32_16, %54 : i32
    %c1_i32_17 = arith.constant 1 : i32
    %56:3 = scf.for %arg8 = %c0_i32_16 to %55 step %c1_i32_17 iter_args(%arg9 = %51, %arg10 = %52, %arg11 = %53) -> (vector<8x1xf32>, vector<8x1xf32>, vector<8x8xf32>)  : i32 {
      %c8_i32_57 = arith.constant 8 : i32
      %169 = arith.muli %arg8, %c8_i32_57 : i32
      %170 = tpu.assume_multiple %169, 8 : i32
      %171 = arith.index_cast %170 : i32 to index
      %c40_58 = arith.constant 40 : index
      %172 = vector.load %arg6[%171, %c40_58] : memref<8x96xf32, #tpu.memory_space<vmem>>, vector<8x8xf32>
      %173 = arith.index_cast %170 : i32 to index
      %c72_59 = arith.constant 72 : index
      %174 = vector.load %arg6[%173, %c72_59] : memref<8x96xf32, #tpu.memory_space<vmem>>, vector<8x8xf32>
      %cst_60 = arith.constant dense<0.000000e+00> : vector<8x8xf32>
      %175 = tpu.matmul %50, %172, %cst_60 {dimension_numbers = #tpu.dot_dimension_numbers<[1], [1], [0], [0], [0, 0, 1, 0], [], []>} : vector<8x8xf32>, vector<8x8xf32>, vector<8x8xf32> -> vector<8x8xf32>
      %cst_61 = arith.constant dense<0xFF800000> : vector<8xf32>
      %176 = vector.multi_reduction <maximumf>, %175, %cst_61 [1] : vector<8x8xf32> to vector<8xf32>
      %177 = vector.shape_cast %176 : vector<8xf32> to vector<8x1xf32>
      %178 = arith.maximumf %arg9, %177 : vector<8x1xf32>
      %179 = arith.subf %arg9, %178 : vector<8x1xf32>
      %180 = math.exp %179 : vector<8x1xf32>
      %181 = vector.broadcast %178 : vector<8x1xf32> to vector<8x8xf32>
      %182 = arith.subf %175, %181 : vector<8x8xf32>
      %183 = math.exp %182 : vector<8x8xf32>
      %184 = arith.mulf %180, %arg10 : vector<8x1xf32>
      %cst_62 = arith.constant dense<0.000000e+00> : vector<8xf32>
      %185 = vector.multi_reduction <add>, %183, %cst_62 [1] : vector<8x8xf32> to vector<8xf32>
      %186 = vector.shape_cast %185 : vector<8xf32> to vector<8x1xf32>
      %187 = arith.addf %184, %186 : vector<8x1xf32>
      %188 = vector.broadcast %180 : vector<8x1xf32> to vector<8x8xf32>
      %189 = arith.mulf %188, %arg11 : vector<8x8xf32>
      %cst_63 = arith.constant dense<0.000000e+00> : vector<8x8xf32>
      %190 = tpu.matmul %183, %174, %cst_63 {dimension_numbers = #tpu.dot_dimension_numbers<[1], [0], [0], [1], [0, 0, 1, 1], [], []>} : vector<8x8xf32>, vector<8x8xf32>, vector<8x8xf32> -> vector<8x8xf32>
      %191 = arith.addf %189, %190 : vector<8x8xf32>
      scf.yield %178, %187, %191 : vector<8x1xf32>, vector<8x1xf32>, vector<8x8xf32>
    }
    %57 = arith.index_cast %4 : i32 to index
    %c40 = arith.constant 40 : index
    %58 = vector.load %arg6[%57, %c40] : memref<8x96xf32, #tpu.memory_space<vmem>>, vector<8x8xf32>
    %59 = arith.index_cast %4 : i32 to index
    %c72 = arith.constant 72 : index
    %60 = vector.load %arg6[%59, %c72] : memref<8x96xf32, #tpu.memory_space<vmem>>, vector<8x8xf32>
    %cst_18 = arith.constant dense<0.000000e+00> : vector<8x8xf32>
    %61 = tpu.matmul %50, %58, %cst_18 {dimension_numbers = #tpu.dot_dimension_numbers<[1], [1], [0], [0], [0, 0, 1, 0], [], []>} : vector<8x8xf32>, vector<8x8xf32>, vector<8x8xf32> -> vector<8x8xf32>
    %62 = arith.addf %61, %10 : vector<8x8xf32>
    %cst_19 = arith.constant dense<0xFF800000> : vector<8xf32>
    %63 = vector.multi_reduction <maximumf>, %62, %cst_19 [1] : vector<8x8xf32> to vector<8xf32>
    %64 = vector.shape_cast %63 : vector<8xf32> to vector<8x1xf32>
    %65 = arith.maximumf %56#0, %64 : vector<8x1xf32>
    %66 = arith.subf %56#0, %65 : vector<8x1xf32>
    %67 = math.exp %66 : vector<8x1xf32>
    %68 = vector.broadcast %65 : vector<8x1xf32> to vector<8x8xf32>
    %69 = arith.subf %62, %68 : vector<8x8xf32>
    %70 = math.exp %69 : vector<8x8xf32>
    %71 = arith.mulf %67, %56#1 : vector<8x1xf32>
    %cst_20 = arith.constant dense<0.000000e+00> : vector<8xf32>
    %72 = vector.multi_reduction <add>, %70, %cst_20 [1] : vector<8x8xf32> to vector<8xf32>
    %73 = vector.shape_cast %72 : vector<8xf32> to vector<8x1xf32>
    %74 = arith.addf %71, %73 : vector<8x1xf32>
    %75 = vector.broadcast %67 : vector<8x1xf32> to vector<8x8xf32>
    %76 = arith.mulf %75, %56#2 : vector<8x8xf32>
    %cst_21 = arith.constant dense<0.000000e+00> : vector<8x8xf32>
    %77 = tpu.matmul %70, %60, %cst_21 {dimension_numbers = #tpu.dot_dimension_numbers<[1], [0], [0], [1], [0, 0, 1, 1], [], []>} : vector<8x8xf32>, vector<8x8xf32>, vector<8x8xf32> -> vector<8x8xf32>
    %78 = arith.addf %76, %77 : vector<8x8xf32>
    %79 = tpu.reciprocal %74 {approx = true} : vector<8x1xf32> -> vector<8x1xf32>
    %80 = arith.mulf %74, %79 : vector<8x1xf32>
    %cst_22 = arith.constant 2.000000e+00 : f32
    %81 = vector.broadcast %cst_22 : f32 to vector<8x1xf32>
    %82 = arith.subf %81, %80 : vector<8x1xf32>
    %83 = arith.mulf %79, %82 : vector<8x1xf32>
    %84 = vector.broadcast %83 : vector<8x1xf32> to vector<8x8xf32>
    %85 = arith.mulf %78, %84 : vector<8x8xf32>
    %c0_23 = arith.constant 0 : index
    %c8_24 = arith.constant 8 : index
    %86 = vector.load %arg7[%c0_23, %c8_24] : memref<8x32xf32, #tpu.memory_space<vmem>>, vector<8x8xf32>
    tpu.vector_store %arg7[%c0_23, %c8_24], %85 {strides = array<i32>} : memref<8x32xf32, #tpu.memory_space<vmem>>, vector<8x8xf32>,
    %87 = arith.index_cast %4 : i32 to index
    %c16 = arith.constant 16 : index
    %88 = vector.load %arg6[%87, %c16] : memref<8x96xf32, #tpu.memory_space<vmem>>, vector<8x8xf32>
    %cst_25 = arith.constant 0xFF800000 : f32
    %89 = vector.broadcast %cst_25 : f32 to vector<8x1xf32>
    %cst_26 = arith.constant 0.000000e+00 : f32
    %90 = vector.broadcast %cst_26 : f32 to vector<8x1xf32>
    %cst_27 = arith.constant 0.000000e+00 : f32
    %91 = vector.broadcast %cst_27 : f32 to vector<8x8xf32>
    %c0_i32_28 = arith.constant 0 : i32
    %92 = arith.subi %arg1, %c0_i32_28 : i32
    %93 = arith.addi %c0_i32_28, %92 : i32
    %c1_i32_29 = arith.constant 1 : i32
    %94:3 = scf.for %arg8 = %c0_i32_28 to %93 step %c1_i32_29 iter_args(%arg9 = %89, %arg10 = %90, %arg11 = %91) -> (vector<8x1xf32>, vector<8x1xf32>, vector<8x8xf32>)  : i32 {
      %c8_i32_57 = arith.constant 8 : i32
      %169 = arith.muli %arg8, %c8_i32_57 : i32
      %170 = tpu.assume_multiple %169, 8 : i32
      %171 = arith.index_cast %170 : i32 to index
      %c48_58 = arith.constant 48 : index
      %172 = vector.load %arg6[%171, %c48_58] : memref<8x96xf32, #tpu.memory_space<vmem>>, vector<8x8xf32>
      %173 = arith.index_cast %170 : i32 to index
      %c80_59 = arith.constant 80 : index
      %174 = vector.load %arg6[%173, %c80_59] : memref<8x96xf32, #tpu.memory_space<vmem>>, vector<8x8xf32>
      %cst_60 = arith.constant dense<0.000000e+00> : vector<8x8xf32>
      %175 = tpu.matmul %88, %172, %cst_60 {dimension_numbers = #tpu.dot_dimension_numbers<[1], [1], [0], [0], [0, 0, 1, 0], [], []>} : vector<8x8xf32>, vector<8x8xf32>, vector<8x8xf32> -> vector<8x8xf32>
      %cst_61 = arith.constant dense<0xFF800000> : vector<8xf32>
      %176 = vector.multi_reduction <maximumf>, %175, %cst_61 [1] : vector<8x8xf32> to vector<8xf32>
      %177 = vector.shape_cast %176 : vector<8xf32> to vector<8x1xf32>
      %178 = arith.maximumf %arg9, %177 : vector<8x1xf32>
      %179 = arith.subf %arg9, %178 : vector<8x1xf32>
      %180 = math.exp %179 : vector<8x1xf32>
      %181 = vector.broadcast %178 : vector<8x1xf32> to vector<8x8xf32>
      %182 = arith.subf %175, %181 : vector<8x8xf32>
      %183 = math.exp %182 : vector<8x8xf32>
      %184 = arith.mulf %180, %arg10 : vector<8x1xf32>
      %cst_62 = arith.constant dense<0.000000e+00> : vector<8xf32>
      %185 = vector.multi_reduction <add>, %183, %cst_62 [1] : vector<8x8xf32> to vector<8xf32>
      %186 = vector.shape_cast %185 : vector<8xf32> to vector<8x1xf32>
      %187 = arith.addf %184, %186 : vector<8x1xf32>
      %188 = vector.broadcast %180 : vector<8x1xf32> to vector<8x8xf32>
      %189 = arith.mulf %188, %arg11 : vector<8x8xf32>
      %cst_63 = arith.constant dense<0.000000e+00> : vector<8x8xf32>
      %190 = tpu.matmul %183, %174, %cst_63 {dimension_numbers = #tpu.dot_dimension_numbers<[1], [0], [0], [1], [0, 0, 1, 1], [], []>} : vector<8x8xf32>, vector<8x8xf32>, vector<8x8xf32> -> vector<8x8xf32>
      %191 = arith.addf %189, %190 : vector<8x8xf32>
      scf.yield %178, %187, %191 : vector<8x1xf32>, vector<8x1xf32>, vector<8x8xf32>
    }
    %95 = arith.index_cast %4 : i32 to index
    %c48 = arith.constant 48 : index
    %96 = vector.load %arg6[%95, %c48] : memref<8x96xf32, #tpu.memory_space<vmem>>, vector<8x8xf32>
    %97 = arith.index_cast %4 : i32 to index
    %c80 = arith.constant 80 : index
    %98 = vector.load %arg6[%97, %c80] : memref<8x96xf32, #tpu.memory_space<vmem>>, vector<8x8xf32>
    %cst_30 = arith.constant dense<0.000000e+00> : vector<8x8xf32>
    %99 = tpu.matmul %88, %96, %cst_30 {dimension_numbers = #tpu.dot_dimension_numbers<[1], [1], [0], [0], [0, 0, 1, 0], [], []>} : vector<8x8xf32>, vector<8x8xf32>, vector<8x8xf32> -> vector<8x8xf32>
    %100 = arith.addf %99, %10 : vector<8x8xf32>
    %cst_31 = arith.constant dense<0xFF800000> : vector<8xf32>
    %101 = vector.multi_reduction <maximumf>, %100, %cst_31 [1] : vector<8x8xf32> to vector<8xf32>
    %102 = vector.shape_cast %101 : vector<8xf32> to vector<8x1xf32>
    %103 = arith.maximumf %94#0, %102 : vector<8x1xf32>
    %104 = arith.subf %94#0, %103 : vector<8x1xf32>
    %105 = math.exp %104 : vector<8x1xf32>
    %106 = vector.broadcast %103 : vector<8x1xf32> to vector<8x8xf32>
    %107 = arith.subf %100, %106 : vector<8x8xf32>
    %108 = math.exp %107 : vector<8x8xf32>
    %109 = arith.mulf %105, %94#1 : vector<8x1xf32>
    %cst_32 = arith.constant dense<0.000000e+00> : vector<8xf32>
    %110 = vector.multi_reduction <add>, %108, %cst_32 [1] : vector<8x8xf32> to vector<8xf32>
    %111 = vector.shape_cast %110 : vector<8xf32> to vector<8x1xf32>
    %112 = arith.addf %109, %111 : vector<8x1xf32>
    %113 = vector.broadcast %105 : vector<8x1xf32> to vector<8x8xf32>
    %114 = arith.mulf %113, %94#2 : vector<8x8xf32>
    %cst_33 = arith.constant dense<0.000000e+00> : vector<8x8xf32>
    %115 = tpu.matmul %108, %98, %cst_33 {dimension_numbers = #tpu.dot_dimension_numbers<[1], [0], [0], [1], [0, 0, 1, 1], [], []>} : vector<8x8xf32>, vector<8x8xf32>, vector<8x8xf32> -> vector<8x8xf32>
    %116 = arith.addf %114, %115 : vector<8x8xf32>
    %117 = tpu.reciprocal %112 {approx = true} : vector<8x1xf32> -> vector<8x1xf32>
    %118 = arith.mulf %112, %117 : vector<8x1xf32>
    %cst_34 = arith.constant 2.000000e+00 : f32
    %119 = vector.broadcast %cst_34 : f32 to vector<8x1xf32>
    %120 = arith.subf %119, %118 : vector<8x1xf32>
    %121 = arith.mulf %117, %120 : vector<8x1xf32>
    %122 = vector.broadcast %121 : vector<8x1xf32> to vector<8x8xf32>
    %123 = arith.mulf %116, %122 : vector<8x8xf32>
    %c0_35 = arith.constant 0 : index
    %c16_36 = arith.constant 16 : index
    %124 = vector.load %arg7[%c0_35, %c16_36] : memref<8x32xf32, #tpu.memory_space<vmem>>, vector<8x8xf32>
    tpu.vector_store %arg7[%c0_35, %c16_36], %123 {strides = array<i32>} : memref<8x32xf32, #tpu.memory_space<vmem>>, vector<8x8xf32>,
    %125 = arith.index_cast %4 : i32 to index
    %c24 = arith.constant 24 : index
    %126 = vector.load %arg6[%125, %c24] : memref<8x96xf32, #tpu.memory_space<vmem>>, vector<8x8xf32>
    %cst_37 = arith.constant 0xFF800000 : f32
    %127 = vector.broadcast %cst_37 : f32 to vector<8x1xf32>
    %cst_38 = arith.constant 0.000000e+00 : f32
    %128 = vector.broadcast %cst_38 : f32 to vector<8x1xf32>
    %cst_39 = arith.constant 0.000000e+00 : f32
    %129 = vector.broadcast %cst_39 : f32 to vector<8x8xf32>
    %c0_i32_40 = arith.constant 0 : i32
    %130 = arith.subi %arg1, %c0_i32_40 : i32
    %131 = arith.addi %c0_i32_40, %130 : i32
    %c1_i32_41 = arith.constant 1 : i32
    %132:3 = scf.for %arg8 = %c0_i32_40 to %131 step %c1_i32_41 iter_args(%arg9 = %127, %arg10 = %128, %arg11 = %129) -> (vector<8x1xf32>, vector<8x1xf32>, vector<8x8xf32>)  : i32 {
      %c8_i32_57 = arith.constant 8 : i32
      %169 = arith.muli %arg8, %c8_i32_57 : i32
      %170 = tpu.assume_multiple %169, 8 : i32
      %171 = arith.index_cast %170 : i32 to index
      %c56_58 = arith.constant 56 : index
      %172 = vector.load %arg6[%171, %c56_58] : memref<8x96xf32, #tpu.memory_space<vmem>>, vector<8x8xf32>
      %173 = arith.index_cast %170 : i32 to index
      %c88_59 = arith.constant 88 : index
      %174 = vector.load %arg6[%173, %c88_59] : memref<8x96xf32, #tpu.memory_space<vmem>>, vector<8x8xf32>
      %cst_60 = arith.constant dense<0.000000e+00> : vector<8x8xf32>
      %175 = tpu.matmul %126, %172, %cst_60 {dimension_numbers = #tpu.dot_dimension_numbers<[1], [1], [0], [0], [0, 0, 1, 0], [], []>} : vector<8x8xf32>, vector<8x8xf32>, vector<8x8xf32> -> vector<8x8xf32>
      %cst_61 = arith.constant dense<0xFF800000> : vector<8xf32>
      %176 = vector.multi_reduction <maximumf>, %175, %cst_61 [1] : vector<8x8xf32> to vector<8xf32>
      %177 = vector.shape_cast %176 : vector<8xf32> to vector<8x1xf32>
      %178 = arith.maximumf %arg9, %177 : vector<8x1xf32>
      %179 = arith.subf %arg9, %178 : vector<8x1xf32>
      %180 = math.exp %179 : vector<8x1xf32>
      %181 = vector.broadcast %178 : vector<8x1xf32> to vector<8x8xf32>
      %182 = arith.subf %175, %181 : vector<8x8xf32>
      %183 = math.exp %182 : vector<8x8xf32>
      %184 = arith.mulf %180, %arg10 : vector<8x1xf32>
      %cst_62 = arith.constant dense<0.000000e+00> : vector<8xf32>
      %185 = vector.multi_reduction <add>, %183, %cst_62 [1] : vector<8x8xf32> to vector<8xf32>
      %186 = vector.shape_cast %185 : vector<8xf32> to vector<8x1xf32>
      %187 = arith.addf %184, %186 : vector<8x1xf32>
      %188 = vector.broadcast %180 : vector<8x1xf32> to vector<8x8xf32>
      %189 = arith.mulf %188, %arg11 : vector<8x8xf32>
      %cst_63 = arith.constant dense<0.000000e+00> : vector<8x8xf32>
      %190 = tpu.matmul %183, %174, %cst_63 {dimension_numbers = #tpu.dot_dimension_numbers<[1], [0], [0], [1], [0, 0, 1, 1], [], []>} : vector<8x8xf32>, vector<8x8xf32>, vector<8x8xf32> -> vector<8x8xf32>
      %191 = arith.addf %189, %190 : vector<8x8xf32>
      scf.yield %178, %187, %191 : vector<8x1xf32>, vector<8x1xf32>, vector<8x8xf32>
    }
    %133 = arith.index_cast %4 : i32 to index
    %c56 = arith.constant 56 : index
    %134 = vector.load %arg6[%133, %c56] : memref<8x96xf32, #tpu.memory_space<vmem>>, vector<8x8xf32>
    %135 = arith.index_cast %4 : i32 to index
    %c88 = arith.constant 88 : index
    %136 = vector.load %arg6[%135, %c88] : memref<8x96xf32, #tpu.memory_space<vmem>>, vector<8x8xf32>
    %cst_42 = arith.constant dense<0.000000e+00> : vector<8x8xf32>
    %137 = tpu.matmul %126, %134, %cst_42 {dimension_numbers = #tpu.dot_dimension_numbers<[1], [1], [0], [0], [0, 0, 1, 0], [], []>} : vector<8x8xf32>, vector<8x8xf32>, vector<8x8xf32> -> vector<8x8xf32>
    %138 = arith.addf %137, %10 : vector<8x8xf32>
    %cst_43 = arith.constant dense<0xFF800000> : vector<8xf32>
    %139 = vector.multi_reduction <maximumf>, %138, %cst_43 [1] : vector<8x8xf32> to vector<8xf32>
    %140 = vector.shape_cast %139 : vector<8xf32> to vector<8x1xf32>
    %141 = arith.maximumf %132#0, %140 : vector<8x1xf32>
    %142 = arith.subf %132#0, %141 : vector<8x1xf32>
    %143 = math.exp %142 : vector<8x1xf32>
    %144 = vector.broadcast %141 : vector<8x1xf32> to vector<8x8xf32>
    %145 = arith.subf %138, %144 : vector<8x8xf32>
    %146 = math.exp %145 : vector<8x8xf32>
    %147 = arith.mulf %143, %132#1 : vector<8x1xf32>
    %cst_44 = arith.constant dense<0.000000e+00> : vector<8xf32>
    %148 = vector.multi_reduction <add>, %146, %cst_44 [1] : vector<8x8xf32> to vector<8xf32>
    %149 = vector.shape_cast %148 : vector<8xf32> to vector<8x1xf32>
    %150 = arith.addf %147, %149 : vector<8x1xf32>
    %151 = vector.broadcast %143 : vector<8x1xf32> to vector<8x8xf32>
    %152 = arith.mulf %151, %132#2 : vector<8x8xf32>
    %cst_45 = arith.constant dense<0.000000e+00> : vector<8x8xf32>
    %153 = tpu.matmul %146, %136, %cst_45 {dimension_numbers = #tpu.dot_dimension_numbers<[1], [0], [0], [1], [0, 0, 1, 1], [], []>} : vector<8x8xf32>, vector<8x8xf32>, vector<8x8xf32> -> vector<8x8xf32>
    %154 = arith.addf %152, %153 : vector<8x8xf32>
    %155 = tpu.reciprocal %150 {approx = true} : vector<8x1xf32> -> vector<8x1xf32>
    %156 = arith.mulf %150, %155 : vector<8x1xf32>
    %cst_46 = arith.constant 2.000000e+00 : f32
    %157 = vector.broadcast %cst_46 : f32 to vector<8x1xf32>
    %158 = arith.subf %157, %156 : vector<8x1xf32>
    %159 = arith.mulf %155, %158 : vector<8x1xf32>
    %160 = vector.broadcast %159 : vector<8x1xf32> to vector<8x8xf32>
    %161 = arith.mulf %154, %160 : vector<8x8xf32>
    %c0_47 = arith.constant 0 : index
    %c24_48 = arith.constant 24 : index
    %162 = vector.load %arg7[%c0_47, %c24_48] : memref<8x32xf32, #tpu.memory_space<vmem>>, vector<8x8xf32>
    tpu.vector_store %arg7[%c0_47, %c24_48], %161 {strides = array<i32>} : memref<8x32xf32, #tpu.memory_space<vmem>>, vector<8x8xf32>,
    %c0_49 = arith.constant 0 : index
    %c0_50 = arith.constant 0 : index
    %163 = vector.load %arg7[%c0_49, %c0_50] : memref<8x32xf32, #tpu.memory_space<vmem>>, vector<8x32xf32>
    %c0_51 = arith.constant 0 : index
    %c0_52 = arith.constant 0 : index
    %164 = vector.load %arg4[%c0_51, %c0_52] : memref<32x32xf32, #tpu.memory_space<vmem>>, vector<32x32xf32>
    %cst_53 = arith.constant dense<0.000000e+00> : vector<8x32xf32>
    %165 = tpu.matmul %163, %164, %cst_53 {dimension_numbers = #tpu.dot_dimension_numbers<[1], [0], [0], [1], [0, 0, 1, 1], [], []>} : vector<8x32xf32>, vector<32x32xf32>, vector<8x32xf32> -> vector<8x32xf32>
    %c0_54 = arith.constant 0 : index
    %c0_55 = arith.constant 0 : index
    %c0_56 = arith.constant 0 : index
    %166 = vector.load %arg5[%c0_54, %c0_55, %c0_56] : memref<1x8x32xf32, #tpu.memory_space<vmem>>, vector<1x8x32xf32>
    %167 = vector.shape_cast %166 : vector<1x8x32xf32> to vector<8x32xf32>
    %168 = vector.shape_cast %165 : vector<8x32xf32> to vector<1x8x32xf32>
    tpu.vector_store %arg5[%c0_54, %c0_55, %c0_56], %168 {strides = array<i32>} : memref<1x8x32xf32, #tpu.memory_space<vmem>>, vector<1x8x32xf32>,
    return
  }
  func.func @transform_0(%arg0: i32, %arg1: i32) -> (i32, i32, i32) {
    %c0_i32 = arith.constant 0 : i32
    %c0_i32_0 = arith.constant 0 : i32
    %c0_i32_1 = arith.constant 0 : i32
    return %arg0, %c0_i32, %c0_i32_0 : i32, i32, i32
  }
  func.func @transform_1(%arg0: i32, %arg1: i32) -> (i32, i32) {
    %c0_i32 = arith.constant 0 : i32
    %c0_i32_0 = arith.constant 0 : i32
    %c0_i32_1 = arith.constant 0 : i32
    return %c0_i32, %c0_i32_0 : i32, i32
  }
  func.func @transform_2(%arg0: i32, %arg1: i32) -> (i32, i32) {
    %c0_i32 = arith.constant 0 : i32
    %c0_i32_0 = arith.constant 0 : i32
    %c0_i32_1 = arith.constant 0 : i32
    return %c0_i32, %c0_i32_0 : i32, i32
  }
  func.func @transform_3(%arg0: i32, %arg1: i32) -> (i32, i32, i32) {
    %c0_i32 = arith.constant 0 : i32
    %c0_i32_0 = arith.constant 0 : i32
    return %arg0, %arg1, %c0_i32 : i32, i32, i32
  }
}

</mosaic_0001>

<llo_original>
// kernel: tpu_custom_call.1
$region0: #{tpu_custom_call.1}
  #allocation0 [shape = 'u32[]', space=smem, size = 0x4, offset = 0x4, fixed_abs, tag = 'smem constant byte address 0x4 - core index']
  #allocation1 [shape = 'u32[72,128]{1,0:T(1,128)}', space=vmem, size = 0x9000, scoped, tag = 'internal scratch']
  #allocation2 [shape = 'f32[8,96]{1,0:T(8,128)}', space=vmem, size = 0x1000, scoped, tag = 'scratch operand']
  #allocation3 [shape = 'f32[8,32]{1,0:T(8,128)}', space=vmem, size = 0x1000, scoped, tag = 'scratch operand']
  %s0 = inlined_call_operand.hbm [shape: f32[2,8,32], index: 0, kind: input, shape index: {}]
  %s1 = inlined_call_operand.hbm [shape: f32[32,96], index: 1, kind: input, shape index: {}]
  %s2 = inlined_call_operand.hbm [shape: f32[32,32], index: 2, kind: input, shape index: {}]
  %s3 = inlined_call_operand.hbm [shape: f32[2,8,32], index: 3, kind: output, shape index: {}]
  %s4 = sld [smem:[#allocation0]]
  $region89: #{tpu_custom_call.1} parent=0
    _
  %s6 = ssub.s32 1, %s4
  %s7 = scalar_select 0, %s6, %s4
  $region1: #{tpu_custom_call.1} parent=0
    #allocation4 [shape = 'u8[8192]{0}', space=vmem, size = 0x2000, scoped, tag = 'input window, operand 0']
    #allocation5 [shape = 's32[2]{0}', space=sflag, size = 0x8, scoped, tag = 'scoped memory for tpu_custom_call.1']
    #allocation6 [shape = 's32[2]{0}', space=sflag, size = 0x8, scoped, tag = 'scoped memory for tpu_custom_call.1']
    #allocation7 [shape = 'u8[16384]{0}', space=vmem, size = 0x4000, scoped, tag = 'input window, operand 1, single buffered']
    #allocation8 [shape = 's32[1]{0}', space=sflag, size = 0x4, scoped, tag = 'scoped memory for tpu_custom_call.1']
    #allocation9 [shape = 'u8[16384]{0}', space=vmem, size = 0x4000, scoped, tag = 'input window, operand 2, single buffered']
    #allocation10 [shape = 'u8[8192]{0}', space=vmem, size = 0x2000, scoped, tag = 'output window, operand 0']
    %8 = vsyncpa [#allocation5], 0
    %s9 = scalar_lea.sflag [#allocation5], 1
    %10 = vsyncpa %s9, 0
    %11 = vsyncpa [#allocation8], 0
    %12 = vsyncpa [#allocation6], 0
    %s13 = scalar_lea.sflag [#allocation6], 1
    %14 = vsyncpa %s13, 0
    loop: start=0, step=1, limit=4
    $region2: #{tpu_custom_call.1} parent=1 // loop_pre_header
      _
    $region3: #{tpu_custom_call.1} parent=1 // loop_header
      %s16 = sphi 0, %s20
      %p17 = scmp.ge.s32.totalorder %s16, 4
      %s23 = sphi 0, %s35
      %s24 = sphi 0, %s31
      %s25 = sphi 0, %s23
      %s26 = sphi 0, %s24
      %s27 = sphi 0, %s25
      %s28 = sphi 0, %s26
      %s38 = sphi 0, %s40
      %s41 = sphi 0, %s38
      %s42 = sphi 0, %s41
      %s58 = sphi 0, %s42
      %s62 = sphi 0, %s62
      %s64 = sphi 0, %s62
      %s65 = sphi 0, %s64
      %s79 = sphi 0, %s65
      %s83 = sphi 0, %s83
      %s85 = sphi 0, %s83
      %s86 = sphi 0, %s85
      %s100 = sphi 0, %s86
      %s108 = sphi 0, %s110
      %s111 = sphi 0, %s108
      %s112 = sphi 0, %s111
      %s128 = sphi 0, %s112
    $region4: #{tpu_custom_call.1} parent=1 // loop_header_branch
      %19 = sbr.rel (%p17) target = $region8
    $region5: #{tpu_custom_call.1} parent=1 // loop_body
      %s21 = ssub.s32 %s16, 1
      %s22 = ssub.s32 %s16, 2
      %s29 = sadd.s32 1, %s24
      %p30 = scmp.ge.s32.totalorder %s29, 1
      %s31 = scalar_select %p30, 0, %s29
      %s32 = sadd.s32 1, %s23
      %s33 = scalar_select %p30, %s32, %s23
      %p34 = scmp.ge.s32.totalorder %s33, 2
      %s35 = scalar_select %p34, 0, %s33
      %s36 = ssub.s32 %s23, %s35
      %p37 = scmp.eq.s32.totalorder %s36, 0
      %s39 = sadd.s32 %s38, 1
      %s40 = scalar_select %p37, %s38, %s39
      %p43 = pneg %p37
      %p44 = scmp.eq.s32.totalorder %s16, 1
      %p45 = por %p43, %p44
      %p46 = scmp.ne.s32.totalorder %s38, %s41
      %p47 = scmp.eq.s32.totalorder %s16, 0
      %p48 = por %p46, %p47
      %p49 = scmp.ne.s32.totalorder %s38, %s41
      %p50 = scmp.eq.s32.totalorder %s21, 1
      %p51 = por %p49, %p50
      %p52 = scmp.ne.s32.totalorder %s41, %s42
      %p53 = scmp.eq.s32.totalorder %s21, 0
      %p54 = por %p52, %p53
      %p55 = scmp.ne.s32.totalorder %s41, %s42
      %p56 = scmp.eq.s32.totalorder %s22, 1
      %p57 = por %p55, %p56
      %p59 = scmp.ne.s32.totalorder %s42, %s58
      %p60 = scmp.eq.s32.totalorder %s22, 0
      %p61 = por %p59, %p60
      %s63 = sadd.s32 %s62, 1
      %p66 = scmp.eq.s32.totalorder %s16, 1
      %p67 = scmp.ne.s32.totalorder %s62, %s64
      %p68 = scmp.eq.s32.totalorder %s16, 0
      %p69 = por %p67, %p68
      %p70 = scmp.ne.s32.totalorder %s62, %s64
      %p71 = scmp.eq.s32.totalorder %s21, 1
      %p72 = por %p70, %p71
      %p73 = scmp.ne.s32.totalorder %s64, %s65
      %p74 = scmp.eq.s32.totalorder %s21, 0
      %p75 = por %p73, %p74
      %p76 = scmp.ne.s32.totalorder %s64, %s65
      %p77 = scmp.eq.s32.totalorder %s22, 1
      %p78 = por %p76, %p77
      %p80 = scmp.ne.s32.totalorder %s65, %s79
      %p81 = scmp.eq.s32.totalorder %s22, 0
      %p82 = por %p80, %p81
      %s84 = sadd.s32 %s83, 1
      %p87 = scmp.eq.s32.totalorder %s16, 1
      %p88 = scmp.ne.s32.totalorder %s83, %s85
      %p89 = scmp.eq.s32.totalorder %s16, 0
      %p90 = por %p88, %p89
      %p91 = scmp.ne.s32.totalorder %s83, %s85
      %p92 = scmp.eq.s32.totalorder %s21, 1
      %p93 = por %p91, %p92
      %p94 = scmp.ne.s32.totalorder %s85, %s86
      %p95 = scmp.eq.s32.totalorder %s21, 0
      %p96 = por %p94, %p95
      %p97 = scmp.ne.s32.totalorder %s85, %s86
      %p98 = scmp.eq.s32.totalorder %s22, 1
      %p99 = por %p97, %p98
      %p101 = scmp.ne.s32.totalorder %s86, %s100
      %p102 = scmp.eq.s32.totalorder %s22, 0
      %p103 = por %p101, %p102
      %s104 = ssub.s32 %s23, %s35
      %s105 = ssub.s32 %s24, %s31
      %s106 = sor.u32 %s104, %s105
      %p107 = scmp.eq.s32.totalorder %s106, 0
      %s109 = sadd.s32 %s108, 1
      %s110 = scalar_select %p107, %s108, %s109
      %p113 = pneg %p107
      %p114 = scmp.eq.s32.totalorder %s16, 1
      %p115 = por %p113, %p114
      %p116 = scmp.ne.s32.totalorder %s108, %s111
      %p117 = scmp.eq.s32.totalorder %s16, 0
      %p118 = por %p116, %p117
      %p119 = scmp.ne.s32.totalorder %s108, %s111
      %p120 = scmp.eq.s32.totalorder %s21, 1
      %p121 = por %p119, %p120
      %p122 = scmp.ne.s32.totalorder %s111, %s112
      %p123 = scmp.eq.s32.totalorder %s21, 0
      %p124 = por %p122, %p123
      %p125 = scmp.ne.s32.totalorder %s111, %s112
      %p126 = scmp.eq.s32.totalorder %s22, 1
      %p127 = por %p125, %p126
      %p129 = scmp.ne.s32.totalorder %s112, %s128
      %p130 = scmp.eq.s32.totalorder %s22, 0
      %p131 = por %p129, %p130
      %p132 = scmp.le.s32.totalorder 1, %s16
      %p133 = scmp.lt.s32.totalorder %s16, 3
      %p134 = pnand %p132, %p133
      %p135 = pneg %p134
      // Predicated region
      $region9: #{tpu_custom_call.1} parent=5 // pred_check
        _
      $region10: #{tpu_custom_call.1} parent=5 // pred_check_branch
        %137 = sbr.rel (%p134) target = $region12
      $region11: #{tpu_custom_call.1} parent=5 // pred_region
        %s138 = ssub.s32 %s16, 1
        // Predicated region
        $region13: #{tpu_custom_call.1} parent=11 // pred_check
          %p139 = pneg %p75
        $region14: #{tpu_custom_call.1} parent=11 // pred_check_branch
          %141 = sbr.rel (%p139) target = $region16
        $region15: #{tpu_custom_call.1} parent=11 // pred_region
          %143 = vsyncadd [#allocation8], 0
          %s144 = sshll.u32 %s1, 4
          %s145 = int_to_ptr.hbm [resolvable:$true] %s144
          %s146 = sshll.u32 [#allocation7], 4
          %s147 = int_to_ptr.vmem [resolvable:$true] %s146
          %152 = dma.hbm_to_vmem [thread:$0]  %s145, 512, %s147, [#allocation8], 128, 128, 8
        $region16: #{tpu_custom_call.1} parent=11 // pred_fallthru
          _
        // Predicated region
        $region17: #{tpu_custom_call.1} parent=11 // pred_check
          %p153 = pneg %p96
        $region18: #{tpu_custom_call.1} parent=11 // pred_check_branch
          %155 = sbr.rel (%p153) target = $region20
        $region19: #{tpu_custom_call.1} parent=11 // pred_region
          %157 = vsyncadd [#allocation8], 0
          %s158 = sshll.u32 %s2, 4
          %s159 = int_to_ptr.hbm [resolvable:$true] %s158
          %s160 = sshll.u32 [#allocation9], 4
          %s161 = int_to_ptr.vmem [resolvable:$true] %s160
          %166 = dma.hbm_to_vmem [thread:$0]  %s159, 512, %s161, [#allocation8], 128, 128, 8
        $region20: #{tpu_custom_call.1} parent=11 // pred_fallthru
          _
      $region12: #{tpu_custom_call.1} parent=5 // pred_fallthru
        _
      %p167 = scmp.lt.s32.totalorder %s16, 2
      // Predicated region
      $region21: #{tpu_custom_call.1} parent=5 // pred_check
        %p168 = pneg %p167
      $region22: #{tpu_custom_call.1} parent=5 // pred_check_branch
        %170 = sbr.rel (%p168) target = $region24
      $region23: #{tpu_custom_call.1} parent=5 // pred_region
        // Predicated region
        $region25: #{tpu_custom_call.1} parent=23 // pred_check
          %p171 = pneg %p48
        $region26: #{tpu_custom_call.1} parent=23 // pred_check_branch
          %173 = sbr.rel (%p171) target = $region28
        $region27: #{tpu_custom_call.1} parent=23 // pred_region
          %s174 = sand.u32 %s38, 1
          %s175 = scalar_lea.sflag [#allocation5], %s174
          %s176 = sand.u32 %s38, 1
          %s177 = smul.addr %s176, 8
          %s178 = scalar_lea.vmem [#allocation4], %s177
          %180 = vsyncadd %s175, 0
          %s181 = smul.addr %s23, 8
          %s182 = scalar_lea.hbm %s0, %s181
          %s184 = sshll.u32 %s182, 4
          %s185 = int_to_ptr.hbm [resolvable:$true] %s184
          %s186 = sshll.u32 %s178, 4
          %s187 = int_to_ptr.vmem [resolvable:$true] %s186
          %189 = dma.hbm_to_vmem [thread:$0]  %s185, 128, %s187, %s175
        $region28: #{tpu_custom_call.1} parent=23 // pred_fallthru
          _
      $region24: #{tpu_custom_call.1} parent=5 // pred_fallthru
        _
      %p190 = scmp.le.s32.totalorder 1, %s16
      %p191 = scmp.lt.s32.totalorder %s16, 3
      %p192 = pnand %p190, %p191
      %p193 = pneg %p192
      // Predicated region
      $region29: #{tpu_custom_call.1} parent=5 // pred_check
        _
      $region30: #{tpu_custom_call.1} parent=5 // pred_check_branch
        %195 = sbr.rel (%p192) target = $region32
      $region31: #{tpu_custom_call.1} parent=5 // pred_region
        %s196 = ssub.s32 %s16, 1
        %s197 = sand.u32 %s41, 1
        %s198 = scalar_lea.sflag [#allocation5], %s197
        %s199 = sand.u32 %s41, 1
        %s200 = smul.addr %s199, 8
        %s201 = scalar_lea.vmem [#allocation4], %s200
        // Predicated region
        $region33: #{tpu_custom_call.1} parent=31 // pred_check
          %p202 = pneg %p54
        $region34: #{tpu_custom_call.1} parent=31 // pred_check_branch
          %204 = sbr.rel (%p202) target = $region36
        $region35: #{tpu_custom_call.1} parent=31 // pred_region
          %206 = dma.done %s198, 128
        $region36: #{tpu_custom_call.1} parent=31 // pred_fallthru
          _
        // Predicated region
        $region37: #{tpu_custom_call.1} parent=31 // pred_check
          %p207 = pneg %p75
        $region38: #{tpu_custom_call.1} parent=31 // pred_check_branch
          %209 = sbr.rel (%p207) target = $region40
        $region39: #{tpu_custom_call.1} parent=31 // pred_region
          %211 = dma.done [#allocation8], 512
        $region40: #{tpu_custom_call.1} parent=31 // pred_fallthru
          _
        // Predicated region
        $region41: #{tpu_custom_call.1} parent=31 // pred_check
          %p212 = pneg %p96
        $region42: #{tpu_custom_call.1} parent=31 // pred_check_branch
          %214 = sbr.rel (%p212) target = $region44
        $region43: #{tpu_custom_call.1} parent=31 // pred_region
          %216 = dma.done [#allocation8], 512
        $region44: #{tpu_custom_call.1} parent=31 // pred_fallthru
          _
        %s217 = sand.u32 %s41, 1
        %s218 = scalar_lea.sflag [#allocation5], %s217
        %s219 = sand.u32 %s41, 1
        %s220 = smul.addr %s219, 8
        %s221 = scalar_lea.vmem [#allocation4], %s220
        %p222 = pneg %p54
        %p223 = pneg %p51
        %p224 = pneg %p75
        %p225 = pneg %p72
        %p226 = pneg %p96
        %p227 = pneg %p93
        %p228 = pneg %p124
        %p229 = pneg %p121
        %s230 = sand.u32 %s111, 1
        %s231 = scalar_lea.sflag [#allocation6], %s230
        %s232 = sand.u32 %s111, 1
        %s233 = smul.addr %s232, 8
        %s234 = scalar_lea.vmem [#allocation10], %s233
        %p235 = scmp.eq.s32.totalorder %s26, 0
        // Predicated region
        $region45: #{tpu_custom_call.1} parent=31 // pred_check
          %p236 = pneg %p235
        $region46: #{tpu_custom_call.1} parent=31 // pred_check_branch
          %238 = sbr.rel (%p236) target = $region48
        $region47: #{tpu_custom_call.1} parent=31 // pred_region
          %v239 = vld [vmem:[%s201] sm:$0xff]
          %v240 = vld [vmem:[#allocation7] sm:$0xff]
          %v241 = vld [vmem:[#allocation7 + $0x8] sm:$0xff]
          %v242 = vld [vmem:[#allocation7 + $0x10] sm:$0xff]
          %v243 = vld [vmem:[#allocation7 + $0x18] sm:$0xff]
          %vm244 = vcmask 261120
          %v246 = vsel %vm244, %v239, 0
          %248 = vmatpush.msra.mxu0 0.0
          %249 = vmatpush.msra.mxu0 0.0
          %250 = vmatpush.msra.mxu0 0.0
          %251 = vmatpush.msra.mxu0 0.0
          %252 = vmatpush.msra.mxu0 0.0
          %253 = vmatpush.msra.mxu0 0.0
          %254 = vmatpush.msra.mxu0 0.0
          %255 = vmatpush.msra.mxu0 0.0
          %256 = vmatpush.msra.mxu0 0.0
          %257 = vmatpush.msra.mxu0 0.0
          %258 = vmatpush.msra.mxu0 0.0
          %259 = vmatpush.msra.mxu0 0.0
          %260 = vmatpush.msra.mxu0 %v243
          %261 = vmatpush.msra.mxu0 %v242
          %262 = vmatpush.msra.mxu0 %v241
          %263 = vmatpush.msra.mxu0 %v240
          %264 = vmatmul.f32.gmra.mxu0 %v246
          %v265 = vpop.f32.mrf.mxu0
          %v266 = vadd.f32 0.0, %v265
          %267 = vdwg.mxu0
          %vm268 = vcmask 785408
          %269 = vst.msk [vmem:[#allocation2] sm:$0xff] %vm268, %v266
        $region48: #{tpu_custom_call.1} parent=31 // pred_fallthru
          _
        %s270 = smul.u32 %s26, 8
        %v271 = vlaneseq
        %v272 = vshrl.u32 %v271, 7
        %v273 = vlaneseq
        %v274 = vand.u32 %v273, 127
        %vm275 = vcmp.le.s32.totalorder %v274, %v272
        %v276 = vsel %vm275, 0.0, -1e+30
        %s277 = scalar_lea.vmem [#allocation2], %s270
        %v278 = vld [vmem:[%s277] sm:$0xff]
        // While loop
        $region49: #{tpu_custom_call.1} parent=31 // loop_pre_header
          _
        $region50: #{tpu_custom_call.1} parent=31 // loop_header
          %s280 = sphi 0, %s282
          %p281 = scmp.ge.s32.totalorder %s280, %s26
          %v285 = vphi -inf, %v323
          %v286 = vphi 0.0, %v334
          %v287 = vphi 0.0, %v362
        $region51: #{tpu_custom_call.1} parent=31 // loop_header_branch
          %284 = sbr.rel (%p281) target = $region55
        $region52: #{tpu_custom_call.1} parent=31 // loop_body
          %s288 = smul.u32 %s280, 8
          %s289 = scalar_lea.vmem [#allocation2], %s288
          %v290 = vld [vmem:[%s289] sm:$0xff]
          %292 = vrot.lane.b32.xlu0 %v290, 96
          %v293 = vpop.permute.xlu0 %292
          %vm294 = vcmask 64512
          %v296 = vsel %vm294, %v278, 0
          %v298 = vsel %vm294, %v293, 0
          %300 = vmatpush.xpose.msra.mxu0 0.0
          %301 = vmatpush.xpose.msra.mxu0 0.0
          %302 = vmatpush.xpose.msra.mxu0 0.0
          %303 = vmatpush.xpose.msra.mxu0 0.0
          %304 = vmatpush.xpose.msra.mxu0 0.0
          %305 = vmatpush.xpose.msra.mxu0 0.0
          %306 = vmatpush.xpose.msra.mxu0 0.0
          %307 = vmatpush.xpose.msra.mxu0 0.0
          %308 = vmatpush.xpose.msra.mxu0 0.0
          %309 = vmatpush.xpose.msra.mxu0 0.0
          %310 = vmatpush.xpose.msra.mxu0 0.0
          %311 = vmatpush.xpose.msra.mxu0 0.0
          %312 = vmatpush.xpose.msra.mxu0 0.0
          %313 = vmatpush.xpose.msra.mxu0 0.0
          %314 = vmatpush.xpose.msra.mxu0 0.0
          %315 = vmatpush.xpose.msra.mxu0 %v298
          %316 = vmatmul.f32.gmra.mxu0 %v296
          %v317 = vpop.f32.mrf.mxu0
          %v318 = vadd.f32 0.0, %v317
          %319 = vdwg.mxu0
          %v320 = vsel %vm294, %v318, -inf
          %321 = vmax.xlane.f32.xlu0 %v320
          %v322 = vpop.xlane.xlu0 %321
          %v323 = vmax.f32 %v285, %v322
          %v324 = vsub.f32 %v285, %v323
          %v325 = vmul.f32 %v324, 1.442695
          %v326 = vpow.pop %v325
          %v327 = vsub.f32 %v318, %v323
          %v328 = vmul.f32 %v327, 1.442695
          %v329 = vpow.pop %v328
          %v330 = vmul.f32 %v326, %v286
          %v331 = vsel %vm294, %v329, 0.0
          %332 = vadd.xlane.f32.xlu0 %v331
          %v333 = vpop.xlane.xlu0 %332
          %v334 = vadd.f32 %v330, %v333
          %v335 = vmul.f32 %v326, %v287
          %336 = vrot.lane.b32.xlu0 %v290, 64
          %v337 = vpop.permute.xlu0 %336
          %v340 = vsel %vm294, %v329, 0
          %342 = vmatpush.msra.mxu0 0.0
          %343 = vmatpush.msra.mxu0 0.0
          %344 = vmatpush.msra.mxu0 0.0
          %345 = vmatpush.msra.mxu0 0.0
          %346 = vmatpush.msra.mxu0 0.0
          %347 = vmatpush.msra.mxu0 0.0
          %348 = vmatpush.msra.mxu0 0.0
          %349 = vmatpush.msra.mxu0 0.0
          %350 = vmatpush.msra.mxu0 0.0
          %351 = vmatpush.msra.mxu0 0.0
          %352 = vmatpush.msra.mxu0 0.0
          %353 = vmatpush.msra.mxu0 0.0
          %354 = vmatpush.msra.mxu0 0.0
          %355 = vmatpush.msra.mxu0 0.0
          %356 = vmatpush.msra.mxu0 0.0
          %357 = vmatpush.msra.mxu0 %v337
          %358 = vmatmul.f32.gmra.mxu0 %v340
          %v359 = vpop.f32.mrf.mxu0
          %v360 = vadd.f32 0.0, %v359
          %361 = vdwg.mxu0
          %v362 = vadd.f32 %v335, %v360
        $region53: #{tpu_custom_call.1} parent=31 // loop_footer
          %s282 = sadd.s32 %s280, 1
        $region54: #{tpu_custom_call.1} parent=31 // loop_footer_branch
          %279 = sbr.rel target = $region50
        $region55: #{tpu_custom_call.1} parent=31 // loop_exit
          _
        %364 = vrot.lane.b32.xlu0 %v278, 96
        %v365 = vpop.permute.xlu0 %364
        %vm366 = vcmask 64512
        %v367 = vsel %vm366, %v278, 0
        %v369 = vsel %vm366, %v365, 0
        %371 = vmatpush.xpose.msra.mxu0 0.0
        %372 = vmatpush.xpose.msra.mxu0 0.0
        %373 = vmatpush.xpose.msra.mxu0 0.0
        %374 = vmatpush.xpose.msra.mxu0 0.0
        %375 = vmatpush.xpose.msra.mxu0 0.0
        %376 = vmatpush.xpose.msra.mxu0 0.0
        %377 = vmatpush.xpose.msra.mxu0 0.0
        %378 = vmatpush.xpose.msra.mxu0 0.0
        %379 = vmatpush.xpose.msra.mxu0 0.0
        %380 = vmatpush.xpose.msra.mxu0 0.0
        %381 = vmatpush.xpose.msra.mxu0 0.0
        %382 = vmatpush.xpose.msra.mxu0 0.0
        %383 = vmatpush.xpose.msra.mxu0 0.0
        %384 = vmatpush.xpose.msra.mxu0 0.0
        %385 = vmatpush.xpose.msra.mxu0 0.0
        %386 = vmatpush.xpose.msra.mxu0 %v369
        %387 = vmatmul.f32.gmra.mxu0 %v367
        %v388 = vpop.f32.mrf.mxu0
        %v389 = vadd.f32 %v276, %v388
        %390 = vdwg.mxu0
        %v391 = vsel %vm366, %v389, -inf
        %392 = vmax.xlane.f32.xlu0 %v391
        %v393 = vpop.xlane.xlu0 %392
        %v394 = vmax.f32 %v285, %v393
        %v395 = vsub.f32 %v285, %v394
        %v396 = vmul.f32 %v395, 1.442695
        %v397 = vpow.pop %v396
        %v398 = vsub.f32 %v389, %v394
        %v399 = vmul.f32 %v398, 1.442695
        %v400 = vpow.pop %v399
        %v401 = vmul.f32 %v397, %v286
        %v402 = vsel %vm366, %v400, 0.0
        %403 = vadd.xlane.f32.xlu0 %v402
        %v404 = vpop.xlane.xlu0 %403
        %v405 = vadd.f32 %v401, %v404
        %v406 = vmul.f32 %v397, %v287
        %407 = vrot.lane.b32.xlu0 %v278, 64
        %v408 = vpop.permute.xlu0 %407
        %v411 = vsel %vm366, %v400, 0
        %413 = vmatpush.msra.mxu0 0.0
        %414 = vmatpush.msra.mxu0 0.0
        %415 = vmatpush.msra.mxu0 0.0
        %416 = vmatpush.msra.mxu0 0.0
        %417 = vmatpush.msra.mxu0 0.0
        %418 = vmatpush.msra.mxu0 0.0
        %419 = vmatpush.msra.mxu0 0.0
        %420 = vmatpush.msra.mxu0 0.0
        %421 = vmatpush.msra.mxu0 0.0
        %422 = vmatpush.msra.mxu0 0.0
        %423 = vmatpush.msra.mxu0 0.0
        %424 = vmatpush.msra.mxu0 0.0
        %425 = vmatpush.msra.mxu0 0.0
        %426 = vmatpush.msra.mxu0 0.0
        %427 = vmatpush.msra.mxu0 0.0
        %428 = vmatpush.msra.mxu0 %v408
        %429 = vmatmul.f32.gmra.mxu0 %v411
        %v430 = vpop.f32.mrf.mxu0
        %v431 = vadd.f32 0.0, %v430
        %432 = vdwg.mxu0
        %v433 = vadd.f32 %v406, %v431
        %v434 = vrcp.pop %v405
        %v435 = vmul.f32 %v405, %v434
        %v436 = vsub.f32 2.0, %v435
        %v437 = vmul.f32 %v434, %v436
        %v438 = vmul.f32 %v433, %v437
        %439 = vst.msk [vmem:[#allocation3] sm:$0xff] %vm366, %v438
        %v440 = vld [vmem:[%s277] sm:$0xff]
        // While loop
        $region56: #{tpu_custom_call.1} parent=31 // loop_pre_header
          _
        $region57: #{tpu_custom_call.1} parent=31 // loop_header
          %s442 = sphi 0, %s444
          %p443 = scmp.ge.s32.totalorder %s442, %s26
          %v447 = vphi -inf, %v486
          %v448 = vphi 0.0, %v497
          %v449 = vphi 0.0, %v525
        $region58: #{tpu_custom_call.1} parent=31 // loop_header_branch
          %446 = sbr.rel (%p443) target = $region62
        $region59: #{tpu_custom_call.1} parent=31 // loop_body
          %s450 = smul.u32 %s442, 8
          %s451 = scalar_lea.vmem [#allocation2], %s450
          %v452 = vld [vmem:[%s451] sm:$0xff]
          %454 = vrot.lane.b32.xlu0 %v440, 120
          %v455 = vpop.permute.xlu0 %454
          %457 = vrot.lane.b32.xlu0 %v452, 88
          %v458 = vpop.permute.xlu0 %457
          %v459 = vsel %vm366, %v455, 0
          %v461 = vsel %vm366, %v458, 0
          %463 = vmatpush.xpose.msra.mxu0 0.0
          %464 = vmatpush.xpose.msra.mxu0 0.0
          %465 = vmatpush.xpose.msra.mxu0 0.0
          %466 = vmatpush.xpose.msra.mxu0 0.0
          %467 = vmatpush.xpose.msra.mxu0 0.0
          %468 = vmatpush.xpose.msra.mxu0 0.0
          %469 = vmatpush.xpose.msra.mxu0 0.0
          %470 = vmatpush.xpose.msra.mxu0 0.0
          %471 = vmatpush.xpose.msra.mxu0 0.0
          %472 = vmatpush.xpose.msra.mxu0 0.0
          %473 = vmatpush.xpose.msra.mxu0 0.0
          %474 = vmatpush.xpose.msra.mxu0 0.0
          %475 = vmatpush.xpose.msra.mxu0 0.0
          %476 = vmatpush.xpose.msra.mxu0 0.0
          %477 = vmatpush.xpose.msra.mxu0 0.0
          %478 = vmatpush.xpose.msra.mxu0 %v461
          %479 = vmatmul.f32.gmra.mxu0 %v459
          %v480 = vpop.f32.mrf.mxu0
          %v481 = vadd.f32 0.0, %v480
          %482 = vdwg.mxu0
          %v483 = vsel %vm366, %v481, -inf
          %484 = vmax.xlane.f32.xlu0 %v483
          %v485 = vpop.xlane.xlu0 %484
          %v486 = vmax.f32 %v447, %v485
          %v487 = vsub.f32 %v447, %v486
          %v488 = vmul.f32 %v487, 1.442695
          %v489 = vpow.pop %v488
          %v490 = vsub.f32 %v481, %v486
          %v491 = vmul.f32 %v490, 1.442695
          %v492 = vpow.pop %v491
          %v493 = vmul.f32 %v489, %v448
          %v494 = vsel %vm366, %v492, 0.0
          %495 = vadd.xlane.f32.xlu0 %v494
          %v496 = vpop.xlane.xlu0 %495
          %v497 = vadd.f32 %v493, %v496
          %v498 = vmul.f32 %v489, %v449
          %499 = vrot.lane.b32.xlu0 %v452, 56
          %v500 = vpop.permute.xlu0 %499
          %v503 = vsel %vm366, %v492, 0
          %505 = vmatpush.msra.mxu0 0.0
          %506 = vmatpush.msra.mxu0 0.0
          %507 = vmatpush.msra.mxu0 0.0
          %508 = vmatpush.msra.mxu0 0.0
          %509 = vmatpush.msra.mxu0 0.0
          %510 = vmatpush.msra.mxu0 0.0
          %511 = vmatpush.msra.mxu0 0.0
          %512 = vmatpush.msra.mxu0 0.0
          %513 = vmatpush.msra.mxu0 0.0
          %514 = vmatpush.msra.mxu0 0.0
          %515 = vmatpush.msra.mxu0 0.0
          %516 = vmatpush.msra.mxu0 0.0
          %517 = vmatpush.msra.mxu0 0.0
          %518 = vmatpush.msra.mxu0 0.0
          %519 = vmatpush.msra.mxu0 0.0
          %520 = vmatpush.msra.mxu0 %v500
          %521 = vmatmul.f32.gmra.mxu0 %v503
          %v522 = vpop.f32.mrf.mxu0
          %v523 = vadd.f32 0.0, %v522
          %524 = vdwg.mxu0
          %v525 = vadd.f32 %v498, %v523
        $region60: #{tpu_custom_call.1} parent=31 // loop_footer
          %s444 = sadd.s32 %s442, 1
        $region61: #{tpu_custom_call.1} parent=31 // loop_footer_branch
          %441 = sbr.rel target = $region57
        $region62: #{tpu_custom_call.1} parent=31 // loop_exit
          _
        %527 = vrot.lane.b32.xlu0 %v440, 120
        %v528 = vpop.permute.xlu0 %527
        %529 = vrot.lane.b32.xlu0 %v440, 88
        %v530 = vpop.permute.xlu0 %529
        %v531 = vsel %vm366, %v528, 0
        %v533 = vsel %vm366, %v530, 0
        %535 = vmatpush.xpose.msra.mxu0 0.0
        %536 = vmatpush.xpose.msra.mxu0 0.0
        %537 = vmatpush.xpose.msra.mxu0 0.0
        %538 = vmatpush.xpose.msra.mxu0 0.0
        %539 = vmatpush.xpose.msra.mxu0 0.0
        %540 = vmatpush.xpose.msra.mxu0 0.0
        %541 = vmatpush.xpose.msra.mxu0 0.0
        %542 = vmatpush.xpose.msra.mxu0 0.0
        %543 = vmatpush.xpose.msra.mxu0 0.0
        %544 = vmatpush.xpose.msra.mxu0 0.0
        %545 = vmatpush.xpose.msra.mxu0 0.0
        %546 = vmatpush.xpose.msra.mxu0 0.0
        %547 = vmatpush.xpose.msra.mxu0 0.0
        %548 = vmatpush.xpose.msra.mxu0 0.0
        %549 = vmatpush.xpose.msra.mxu0 0.0
        %550 = vmatpush.xpose.msra.mxu0 %v533
        %551 = vmatmul.f32.gmra.mxu0 %v531
        %v552 = vpop.f32.mrf.mxu0
        %v553 = vadd.f32 %v276, %v552
        %554 = vdwg.mxu0
        %v555 = vsel %vm366, %v553, -inf
        %556 = vmax.xlane.f32.xlu0 %v555
        %v557 = vpop.xlane.xlu0 %556
        %v558 = vmax.f32 %v447, %v557
        %v559 = vsub.f32 %v447, %v558
        %v560 = vmul.f32 %v559, 1.442695
        %v561 = vpow.pop %v560
        %v562 = vsub.f32 %v553, %v558
        %v563 = vmul.f32 %v562, 1.442695
        %v564 = vpow.pop %v563
        %v565 = vmul.f32 %v561, %v448
        %v566 = vsel %vm366, %v564, 0.0
        %567 = vadd.xlane.f32.xlu0 %v566
        %v568 = vpop.xlane.xlu0 %567
        %v569 = vadd.f32 %v565, %v568
        %v570 = vmul.f32 %v561, %v449
        %571 = vrot.lane.b32.xlu0 %v440, 56
        %v572 = vpop.permute.xlu0 %571
        %v575 = vsel %vm366, %v564, 0
        %577 = vmatpush.msra.mxu0 0.0
        %578 = vmatpush.msra.mxu0 0.0
        %579 = vmatpush.msra.mxu0 0.0
        %580 = vmatpush.msra.mxu0 0.0
        %581 = vmatpush.msra.mxu0 0.0
        %582 = vmatpush.msra.mxu0 0.0
        %583 = vmatpush.msra.mxu0 0.0
        %584 = vmatpush.msra.mxu0 0.0
        %585 = vmatpush.msra.mxu0 0.0
        %586 = vmatpush.msra.mxu0 0.0
        %587 = vmatpush.msra.mxu0 0.0
        %588 = vmatpush.msra.mxu0 0.0
        %589 = vmatpush.msra.mxu0 0.0
        %590 = vmatpush.msra.mxu0 0.0
        %591 = vmatpush.msra.mxu0 0.0
        %592 = vmatpush.msra.mxu0 %v572
        %593 = vmatmul.f32.gmra.mxu0 %v575
        %v594 = vpop.f32.mrf.mxu0
        %v595 = vadd.f32 0.0, %v594
        %596 = vdwg.mxu0
        %v597 = vadd.f32 %v570, %v595
        %v598 = vrcp.pop %v569
        %v599 = vmul.f32 %v569, %v598
        %v600 = vsub.f32 2.0, %v599
        %v601 = vmul.f32 %v598, %v600
        %v602 = vmul.f32 %v597, %v601
        %604 = vrot.lane.b32.xlu0 %v602, 8
        %v605 = vpop.permute.xlu0 %604
        %vm607 = vcmask 130112
        %608 = vst.msk [vmem:[#allocation3] sm:$0xff] %vm607, %v605
        %v609 = vld [vmem:[%s277] sm:$0xff]
        // While loop
        $region63: #{tpu_custom_call.1} parent=31 // loop_pre_header
          _
        $region64: #{tpu_custom_call.1} parent=31 // loop_header
          %s611 = sphi 0, %s613
          %p612 = scmp.ge.s32.totalorder %s611, %s26
          %v616 = vphi -inf, %v655
          %v617 = vphi 0.0, %v666
          %v618 = vphi 0.0, %v694
        $region65: #{tpu_custom_call.1} parent=31 // loop_header_branch
          %615 = sbr.rel (%p612) target = $region69
        $region66: #{tpu_custom_call.1} parent=31 // loop_body
          %s619 = smul.u32 %s611, 8
          %s620 = scalar_lea.vmem [#allocation2], %s619
          %v621 = vld [vmem:[%s620] sm:$0xff]
          %623 = vrot.lane.b32.xlu0 %v609, 112
          %v624 = vpop.permute.xlu0 %623
          %626 = vrot.lane.b32.xlu0 %v621, 80
          %v627 = vpop.permute.xlu0 %626
          %v628 = vsel %vm366, %v624, 0
          %v630 = vsel %vm366, %v627, 0
          %632 = vmatpush.xpose.msra.mxu0 0.0
          %633 = vmatpush.xpose.msra.mxu0 0.0
          %634 = vmatpush.xpose.msra.mxu0 0.0
          %635 = vmatpush.xpose.msra.mxu0 0.0
          %636 = vmatpush.xpose.msra.mxu0 0.0
          %637 = vmatpush.xpose.msra.mxu0 0.0
          %638 = vmatpush.xpose.msra.mxu0 0.0
          %639 = vmatpush.xpose.msra.mxu0 0.0
          %640 = vmatpush.xpose.msra.mxu0 0.0
          %641 = vmatpush.xpose.msra.mxu0 0.0
          %642 = vmatpush.xpose.msra.mxu0 0.0
          %643 = vmatpush.xpose.msra.mxu0 0.0
          %644 = vmatpush.xpose.msra.mxu0 0.0
          %645 = vmatpush.xpose.msra.mxu0 0.0
          %646 = vmatpush.xpose.msra.mxu0 0.0
          %647 = vmatpush.xpose.msra.mxu0 %v630
          %648 = vmatmul.f32.gmra.mxu0 %v628
          %v649 = vpop.f32.mrf.mxu0
          %v650 = vadd.f32 0.0, %v649
          %651 = vdwg.mxu0
          %v652 = vsel %vm366, %v650, -inf
          %653 = vmax.xlane.f32.xlu0 %v652
          %v654 = vpop.xlane.xlu0 %653
          %v655 = vmax.f32 %v616, %v654
          %v656 = vsub.f32 %v616, %v655
          %v657 = vmul.f32 %v656, 1.442695
          %v658 = vpow.pop %v657
          %v659 = vsub.f32 %v650, %v655
          %v660 = vmul.f32 %v659, 1.442695
          %v661 = vpow.pop %v660
          %v662 = vmul.f32 %v658, %v617
          %v663 = vsel %vm366, %v661, 0.0
          %664 = vadd.xlane.f32.xlu0 %v663
          %v665 = vpop.xlane.xlu0 %664
          %v666 = vadd.f32 %v662, %v665
          %v667 = vmul.f32 %v658, %v618
          %668 = vrot.lane.b32.xlu0 %v621, 48
          %v669 = vpop.permute.xlu0 %668
          %v672 = vsel %vm366, %v661, 0
          %674 = vmatpush.msra.mxu0 0.0
          %675 = vmatpush.msra.mxu0 0.0
          %676 = vmatpush.msra.mxu0 0.0
          %677 = vmatpush.msra.mxu0 0.0
          %678 = vmatpush.msra.mxu0 0.0
          %679 = vmatpush.msra.mxu0 0.0
          %680 = vmatpush.msra.mxu0 0.0
          %681 = vmatpush.msra.mxu0 0.0
          %682 = vmatpush.msra.mxu0 0.0
          %683 = vmatpush.msra.mxu0 0.0
          %684 = vmatpush.msra.mxu0 0.0
          %685 = vmatpush.msra.mxu0 0.0
          %686 = vmatpush.msra.mxu0 0.0
          %687 = vmatpush.msra.mxu0 0.0
          %688 = vmatpush.msra.mxu0 0.0
          %689 = vmatpush.msra.mxu0 %v669
          %690 = vmatmul.f32.gmra.mxu0 %v672
          %v691 = vpop.f32.mrf.mxu0
          %v692 = vadd.f32 0.0, %v691
          %693 = vdwg.mxu0
          %v694 = vadd.f32 %v667, %v692
        $region67: #{tpu_custom_call.1} parent=31 // loop_footer
          %s613 = sadd.s32 %s611, 1
        $region68: #{tpu_custom_call.1} parent=31 // loop_footer_branch
          %610 = sbr.rel target = $region64
        $region69: #{tpu_custom_call.1} parent=31 // loop_exit
          _
        %696 = vrot.lane.b32.xlu0 %v609, 112
        %v697 = vpop.permute.xlu0 %696
        %698 = vrot.lane.b32.xlu0 %v609, 80
        %v699 = vpop.permute.xlu0 %698
        %v700 = vsel %vm366, %v697, 0
        %v702 = vsel %vm366, %v699, 0
        %704 = vmatpush.xpose.msra.mxu0 0.0
        %705 = vmatpush.xpose.msra.mxu0 0.0
        %706 = vmatpush.xpose.msra.mxu0 0.0
        %707 = vmatpush.xpose.msra.mxu0 0.0
        %708 = vmatpush.xpose.msra.mxu0 0.0
        %709 = vmatpush.xpose.msra.mxu0 0.0
        %710 = vmatpush.xpose.msra.mxu0 0.0
        %711 = vmatpush.xpose.msra.mxu0 0.0
        %712 = vmatpush.xpose.msra.mxu0 0.0
        %713 = vmatpush.xpose.msra.mxu0 0.0
        %714 = vmatpush.xpose.msra.mxu0 0.0
        %715 = vmatpush.xpose.msra.mxu0 0.0
        %716 = vmatpush.xpose.msra.mxu0 0.0
        %717 = vmatpush.xpose.msra.mxu0 0.0
        %718 = vmatpush.xpose.msra.mxu0 0.0
        %719 = vmatpush.xpose.msra.mxu0 %v702
        %720 = vmatmul.f32.gmra.mxu0 %v700
        %v721 = vpop.f32.mrf.mxu0
        %v722 = vadd.f32 %v276, %v721
        %723 = vdwg.mxu0
        %v724 = vsel %vm366, %v722, -inf
        %725 = vmax.xlane.f32.xlu0 %v724
        %v726 = vpop.xlane.xlu0 %725
        %v727 = vmax.f32 %v616, %v726
        %v728 = vsub.f32 %v616, %v727
        %v729 = vmul.f32 %v728, 1.442695
        %v730 = vpow.pop %v729
        %v731 = vsub.f32 %v722, %v727
        %v732 = vmul.f32 %v731, 1.442695
        %v733 = vpow.pop %v732
        %v734 = vmul.f32 %v730, %v617
        %v735 = vsel %vm366, %v733, 0.0
        %736 = vadd.xlane.f32.xlu0 %v735
        %v737 = vpop.xlane.xlu0 %736
        %v738 = vadd.f32 %v734, %v737
        %v739 = vmul.f32 %v730, %v618
        %740 = vrot.lane.b32.xlu0 %v609, 48
        %v741 = vpop.permute.xlu0 %740
        %v744 = vsel %vm366, %v733, 0
        %746 = vmatpush.msra.mxu0 0.0
        %747 = vmatpush.msra.mxu0 0.0
        %748 = vmatpush.msra.mxu0 0.0
        %749 = vmatpush.msra.mxu0 0.0
        %750 = vmatpush.msra.mxu0 0.0
        %751 = vmatpush.msra.mxu0 0.0
        %752 = vmatpush.msra.mxu0 0.0
        %753 = vmatpush.msra.mxu0 0.0
        %754 = vmatpush.msra.mxu0 0.0
        %755 = vmatpush.msra.mxu0 0.0
        %756 = vmatpush.msra.mxu0 0.0
        %757 = vmatpush.msra.mxu0 0.0
        %758 = vmatpush.msra.mxu0 0.0
        %759 = vmatpush.msra.mxu0 0.0
        %760 = vmatpush.msra.mxu0 0.0
        %761 = vmatpush.msra.mxu0 %v741
        %762 = vmatmul.f32.gmra.mxu0 %v744
        %v763 = vpop.f32.mrf.mxu0
        %v764 = vadd.f32 0.0, %v763
        %765 = vdwg.mxu0
        %v766 = vadd.f32 %v739, %v764
        %v767 = vrcp.pop %v738
        %v768 = vmul.f32 %v738, %v767
        %v769 = vsub.f32 2.0, %v768
        %v770 = vmul.f32 %v767, %v769
        %v771 = vmul.f32 %v766, %v770
        %773 = vrot.lane.b32.xlu0 %v771, 16
        %v774 = vpop.permute.xlu0 %773
        %vm776 = vcmask 195712
        %777 = vst.msk [vmem:[#allocation3] sm:$0xff] %vm776, %v774
        %v778 = vld [vmem:[%s277] sm:$0xff]
        // While loop
        $region70: #{tpu_custom_call.1} parent=31 // loop_pre_header
          _
        $region71: #{tpu_custom_call.1} parent=31 // loop_header
          %s780 = sphi 0, %s782
          %p781 = scmp.ge.s32.totalorder %s780, %s26
          %v785 = vphi -inf, %v824
          %v786 = vphi 0.0, %v835
          %v787 = vphi 0.0, %v863
        $region72: #{tpu_custom_call.1} parent=31 // loop_header_branch
          %784 = sbr.rel (%p781) target = $region76
        $region73: #{tpu_custom_call.1} parent=31 // loop_body
          %s788 = smul.u32 %s780, 8
          %s789 = scalar_lea.vmem [#allocation2], %s788
          %v790 = vld [vmem:[%s789] sm:$0xff]
          %792 = vrot.lane.b32.xlu0 %v778, 104
          %v793 = vpop.permute.xlu0 %792
          %795 = vrot.lane.b32.xlu0 %v790, 72
          %v796 = vpop.permute.xlu0 %795
          %v797 = vsel %vm366, %v793, 0
          %v799 = vsel %vm366, %v796, 0
          %801 = vmatpush.xpose.msra.mxu0 0.0
          %802 = vmatpush.xpose.msra.mxu0 0.0
          %803 = vmatpush.xpose.msra.mxu0 0.0
          %804 = vmatpush.xpose.msra.mxu0 0.0
          %805 = vmatpush.xpose.msra.mxu0 0.0
          %806 = vmatpush.xpose.msra.mxu0 0.0
          %807 = vmatpush.xpose.msra.mxu0 0.0
          %808 = vmatpush.xpose.msra.mxu0 0.0
          %809 = vmatpush.xpose.msra.mxu0 0.0
          %810 = vmatpush.xpose.msra.mxu0 0.0
          %811 = vmatpush.xpose.msra.mxu0 0.0
          %812 = vmatpush.xpose.msra.mxu0 0.0
          %813 = vmatpush.xpose.msra.mxu0 0.0
          %814 = vmatpush.xpose.msra.mxu0 0.0
          %815 = vmatpush.xpose.msra.mxu0 0.0
          %816 = vmatpush.xpose.msra.mxu0 %v799
          %817 = vmatmul.f32.gmra.mxu0 %v797
          %v818 = vpop.f32.mrf.mxu0
          %v819 = vadd.f32 0.0, %v818
          %820 = vdwg.mxu0
          %v821 = vsel %vm366, %v819, -inf
          %822 = vmax.xlane.f32.xlu0 %v821
          %v823 = vpop.xlane.xlu0 %822
          %v824 = vmax.f32 %v785, %v823
          %v825 = vsub.f32 %v785, %v824
          %v826 = vmul.f32 %v825, 1.442695
          %v827 = vpow.pop %v826
          %v828 = vsub.f32 %v819, %v824
          %v829 = vmul.f32 %v828, 1.442695
          %v830 = vpow.pop %v829
          %v831 = vmul.f32 %v827, %v786
          %v832 = vsel %vm366, %v830, 0.0
          %833 = vadd.xlane.f32.xlu0 %v832
          %v834 = vpop.xlane.xlu0 %833
          %v835 = vadd.f32 %v831, %v834
          %v836 = vmul.f32 %v827, %v787
          %837 = vrot.lane.b32.xlu0 %v790, 40
          %v838 = vpop.permute.xlu0 %837
          %v841 = vsel %vm366, %v830, 0
          %843 = vmatpush.msra.mxu0 0.0
          %844 = vmatpush.msra.mxu0 0.0
          %845 = vmatpush.msra.mxu0 0.0
          %846 = vmatpush.msra.mxu0 0.0
          %847 = vmatpush.msra.mxu0 0.0
          %848 = vmatpush.msra.mxu0 0.0
          %849 = vmatpush.msra.mxu0 0.0
          %850 = vmatpush.msra.mxu0 0.0
          %851 = vmatpush.msra.mxu0 0.0
          %852 = vmatpush.msra.mxu0 0.0
          %853 = vmatpush.msra.mxu0 0.0
          %854 = vmatpush.msra.mxu0 0.0
          %855 = vmatpush.msra.mxu0 0.0
          %856 = vmatpush.msra.mxu0 0.0
          %857 = vmatpush.msra.mxu0 0.0
          %858 = vmatpush.msra.mxu0 %v838
          %859 = vmatmul.f32.gmra.mxu0 %v841
          %v860 = vpop.f32.mrf.mxu0
          %v861 = vadd.f32 0.0, %v860
          %862 = vdwg.mxu0
          %v863 = vadd.f32 %v836, %v861
        $region74: #{tpu_custom_call.1} parent=31 // loop_footer
          %s782 = sadd.s32 %s780, 1
        $region75: #{tpu_custom_call.1} parent=31 // loop_footer_branch
          %779 = sbr.rel target = $region71
        $region76: #{tpu_custom_call.1} parent=31 // loop_exit
          _
        %865 = vrot.lane.b32.xlu0 %v778, 104
        %v866 = vpop.permute.xlu0 %865
        %867 = vrot.lane.b32.xlu0 %v778, 72
        %v868 = vpop.permute.xlu0 %867
        %v869 = vsel %vm366, %v866, 0
        %v871 = vsel %vm366, %v868, 0
        %873 = vmatpush.xpose.msra.mxu0 0.0
        %874 = vmatpush.xpose.msra.mxu0 0.0
        %875 = vmatpush.xpose.msra.mxu0 0.0
        %876 = vmatpush.xpose.msra.mxu0 0.0
        %877 = vmatpush.xpose.msra.mxu0 0.0
        %878 = vmatpush.xpose.msra.mxu0 0.0
        %879 = vmatpush.xpose.msra.mxu0 0.0
        %880 = vmatpush.xpose.msra.mxu0 0.0
        %881 = vmatpush.xpose.msra.mxu0 0.0
        %882 = vmatpush.xpose.msra.mxu0 0.0
        %883 = vmatpush.xpose.msra.mxu0 0.0
        %884 = vmatpush.xpose.msra.mxu0 0.0
        %885 = vmatpush.xpose.msra.mxu0 0.0
        %886 = vmatpush.xpose.msra.mxu0 0.0
        %887 = vmatpush.xpose.msra.mxu0 0.0
        %888 = vmatpush.xpose.msra.mxu0 %v871
        %889 = vmatmul.f32.gmra.mxu0 %v869
        %v890 = vpop.f32.mrf.mxu0
        %v891 = vadd.f32 %v276, %v890
        %892 = vdwg.mxu0
        %v893 = vsel %vm366, %v891, -inf
        %894 = vmax.xlane.f32.xlu0 %v893
        %v895 = vpop.xlane.xlu0 %894
        %v896 = vmax.f32 %v785, %v895
        %v897 = vsub.f32 %v785, %v896
        %v898 = vmul.f32 %v897, 1.442695
        %v899 = vpow.pop %v898
        %v900 = vsub.f32 %v891, %v896
        %v901 = vmul.f32 %v900, 1.442695
        %v902 = vpow.pop %v901
        %v903 = vmul.f32 %v899, %v786
        %v904 = vsel %vm366, %v902, 0.0
        %905 = vadd.xlane.f32.xlu0 %v904
        %v906 = vpop.xlane.xlu0 %905
        %v907 = vadd.f32 %v903, %v906
        %v908 = vmul.f32 %v899, %v787
        %909 = vrot.lane.b32.xlu0 %v778, 40
        %v910 = vpop.permute.xlu0 %909
        %v913 = vsel %vm366, %v902, 0
        %915 = vmatpush.msra.mxu0 0.0
        %916 = vmatpush.msra.mxu0 0.0
        %917 = vmatpush.msra.mxu0 0.0
        %918 = vmatpush.msra.mxu0 0.0
        %919 = vmatpush.msra.mxu0 0.0
        %920 = vmatpush.msra.mxu0 0.0
        %921 = vmatpush.msra.mxu0 0.0
        %922 = vmatpush.msra.mxu0 0.0
        %923 = vmatpush.msra.mxu0 0.0
        %924 = vmatpush.msra.mxu0 0.0
        %925 = vmatpush.msra.mxu0 0.0
        %926 = vmatpush.msra.mxu0 0.0
        %927 = vmatpush.msra.mxu0 0.0
        %928 = vmatpush.msra.mxu0 0.0
        %929 = vmatpush.msra.mxu0 0.0
        %930 = vmatpush.msra.mxu0 %v910
        %931 = vmatmul.f32.gmra.mxu0 %v913
        %v932 = vpop.f32.mrf.mxu0
        %v933 = vadd.f32 0.0, %v932
        %934 = vdwg.mxu0
        %v935 = vadd.f32 %v908, %v933
        %v936 = vrcp.pop %v907
        %v937 = vmul.f32 %v907, %v936
        %v938 = vsub.f32 2.0, %v937
        %v939 = vmul.f32 %v936, %v938
        %v940 = vmul.f32 %v935, %v939
        %942 = vrot.lane.b32.xlu0 %v940, 24
        %v943 = vpop.permute.xlu0 %942
        %vm945 = vcmask 261312
        %946 = vst.msk [vmem:[#allocation3] sm:$0xff] %vm945, %v943
        %v947 = vld [vmem:[#allocation3] sm:$0xff]
        %v948 = vld [vmem:[#allocation9] sm:$0xff]
        %v949 = vld [vmem:[#allocation9 + $0x8] sm:$0xff]
        %v950 = vld [vmem:[#allocation9 + $0x10] sm:$0xff]
        %v951 = vld [vmem:[#allocation9 + $0x18] sm:$0xff]
        %vm952 = vcmask 261120
        %v954 = vsel %vm952, %v947, 0
        %956 = vmatpush.msra.mxu0 0.0
        %957 = vmatpush.msra.mxu0 0.0
        %958 = vmatpush.msra.mxu0 0.0
        %959 = vmatpush.msra.mxu0 0.0
        %960 = vmatpush.msra.mxu0 0.0
        %961 = vmatpush.msra.mxu0 0.0
        %962 = vmatpush.msra.mxu0 0.0
        %963 = vmatpush.msra.mxu0 0.0
        %964 = vmatpush.msra.mxu0 0.0
        %965 = vmatpush.msra.mxu0 0.0
        %966 = vmatpush.msra.mxu0 0.0
        %967 = vmatpush.msra.mxu0 0.0
        %968 = vmatpush.msra.mxu0 %v951
        %969 = vmatpush.msra.mxu0 %v950
        %970 = vmatpush.msra.mxu0 %v949
        %971 = vmatpush.msra.mxu0 %v948
        %972 = vmatmul.f32.gmra.mxu0 %v954
        %v973 = vpop.f32.mrf.mxu0
        %v974 = vadd.f32 0.0, %v973
        %975 = vdwg.mxu0
        %976 = vst.msk [vmem:[%s234] sm:$0xff] %vm952, %v974
        %s977 = sand.u32 %s111, 1
        %s978 = scalar_lea.sflag [#allocation6], %s977
        %s979 = sand.u32 %s111, 1
        %s980 = smul.addr %s979, 8
        %s981 = scalar_lea.vmem [#allocation10], %s980
        // Predicated region
        $region77: #{tpu_custom_call.1} parent=31 // pred_check
          %p982 = pneg %p121
        $region78: #{tpu_custom_call.1} parent=31 // pred_check_branch
          %984 = sbr.rel (%p982) target = $region80
        $region79: #{tpu_custom_call.1} parent=31 // pred_region
          %986 = vsyncadd %s978, 0
          %s987 = sadd.s32 %s26, %s25
          %s988 = smul.addr %s987, 8
          %s989 = scalar_lea.hbm %s3, %s988
          %s991 = sshll.u32 %s981, 4
          %s992 = int_to_ptr.vmem [resolvable:$true] %s991
          %s993 = sshll.u32 %s989, 4
          %s994 = int_to_ptr.hbm [resolvable:$true] %s993
          %996 = dma.vmem_to_hbm [thread:$0]  %s992, 128, %s994, %s978
        $region80: #{tpu_custom_call.1} parent=31 // pred_fallthru
          _
      $region32: #{tpu_custom_call.1} parent=5 // pred_fallthru
        _
      %p997 = scmp.le.s32.totalorder 2, %s16
      // Predicated region
      $region81: #{tpu_custom_call.1} parent=5 // pred_check
        %p998 = pneg %p997
      $region82: #{tpu_custom_call.1} parent=5 // pred_check_branch
        %1000 = sbr.rel (%p998) target = $region84
      $region83: #{tpu_custom_call.1} parent=5 // pred_region
        %s1001 = ssub.s32 %s16, 2
        // Predicated region
        $region85: #{tpu_custom_call.1} parent=83 // pred_check
          %p1002 = pneg %p127
        $region86: #{tpu_custom_call.1} parent=83 // pred_check_branch
          %1004 = sbr.rel (%p1002) target = $region88
        $region87: #{tpu_custom_call.1} parent=83 // pred_region
          %s1005 = sand.u32 %s112, 1
          %s1006 = scalar_lea.sflag [#allocation6], %s1005
          %s1007 = sand.u32 %s112, 1
          %s1008 = smul.addr %s1007, 8
          %s1009 = scalar_lea.vmem [#allocation10], %s1008
          %1011 = dma.done %s1006, 128
        $region88: #{tpu_custom_call.1} parent=83 // pred_fallthru
          _
      $region84: #{tpu_custom_call.1} parent=5 // pred_fallthru
        _
    $region6: #{tpu_custom_call.1} parent=1 // loop_footer
      %s20 = sadd.s32 1, %s16
    $region7: #{tpu_custom_call.1} parent=1 // loop_footer_branch
      %15 = sbr.rel target = $region3
    $region8: #{tpu_custom_call.1} parent=1 // loop_exit
      _
    %1012 = vsyncpa [#allocation5], 1
    %s1013 = scalar_lea.sflag [#allocation5], 1
    %1014 = vsyncpa %s1013, 1
    %1015 = vsyncpa [#allocation8], 1
    %1016 = vsyncpa [#allocation6], 1
    %s1017 = scalar_lea.sflag [#allocation6], 1
    %1018 = vsyncpa %s1017, 1

</llo_original>
